<compile_context>
chip_gen: v7x
topology: tpu7x:2x2x1
jax: 0.10.0
libtpu: 0.0.40
codegen_flags: <defaults>
</compile_context>

<pallas_src>
import functools

import jax
import jax.numpy as jnp
from jax import lax
from jax.experimental import pallas as pl
from jax.experimental.pallas import tpu as pltpu


# ----------------------------------------------------------------------------
# Kernel 1: 3x3 conv (9 shifted matmuls) + 1x1 conv + all log_var-side math.
# Works on the padded-flat spatial layout of length Mp = (nh+2)*(nw+2);
# only interior positions are meaningful (border positions are discarded /
# masked out of the KL sum).
# ----------------------------------------------------------------------------
def _conv_kernel(gpf_ref, mask_ref, w3_ref, b3_ref, w1_ref, b1_ref,
                 mu_ref, zhat_ref, kl_ref, *, mp, pad, nwp):
    hd = w1_ref.shape[0]
    mask = mask_ref[...]                                   # (1, Mp) interior mask

    # --- mu: 3x3 / padding=1 conv as 9 accumulated (hd,C)x(C,Mp) matmuls ---
    mu = jnp.zeros((hd, mp), jnp.float32)
    for ky in range(3):
        for kx in range(3):
            off = pad + (ky - 1) * nwp + (kx - 1)          # static, in-bounds
            rhs = gpf_ref[0, :, pl.ds(off, mp)]            # (C, Mp) contiguous slice
            mu = mu + jnp.dot(w3_ref[ky * 3 + kx], rhs,
                              preferred_element_type=jnp.float32)
    mu = mu + b3_ref[...]

    # --- log_var: 1x1 conv on the (unshifted) padded-flat map ---
    centre = gpf_ref[0, :, pl.ds(pad, mp)]                 # (C, Mp)
    lv = jnp.dot(w1_ref[...], centre,
                 preferred_element_type=jnp.float32) + b1_ref[...]

    # --- per-batch KL partial sum (interior positions only) ---
    kl_b = jnp.sum((1.0 + 2.0 * lv - mu * mu - jnp.exp(2.0 * lv)) * mask)

    mu_ref[0] = mu.astype(mu_ref.dtype)                    # (hd, Mp), lane-dense
    zhat_ref[0] = (mu * (1.0 - lv)).astype(zhat_ref.dtype)  # z_hat before gama.mean()
    kl_ref[0] = jnp.full((1, 128), kl_b, jnp.float32)


# ----------------------------------------------------------------------------
# Kernel 2: A = relu(z z^T), diag stats, dl-loss partial, diag add, Laplacian.
# ----------------------------------------------------------------------------
def _graph_kernel(z_ref, a_ref, stats_ref):
    z = z_ref[0].astype(jnp.float32)                       # (N, hidden)
    nodes = z.shape[0]

    # A = relu(z @ z^T)
    A = lax.dot_general(z, z, (((1,), (1,)), ((), ())),
                        preferred_element_type=jnp.float32)  # (N, N)
    A = jnp.maximum(A, 0.0)

    # diag(relu(z z^T)) == ||z_i||^2  (analytic, no NxN masked reduce)
    Ad = jnp.sum(z * z, axis=1, keepdims=True)             # (N, 1)
    mean_ad = jnp.maximum(jnp.mean(Ad), 0.001)
    gama_b = jnp.sqrt(1.0 + 1.0 / mean_ad)

    # dl-loss partial: sum of log(Ad + 1e-7) over diagonal entries < 1
    sum_log_b = jnp.sum(jnp.where(Ad < 1.0, jnp.log(Ad + 1e-7), 0.0))

    # add_diag (A += gama*diag(Ad)) and self-loop (A += I): one eye, built late
    rows = lax.broadcasted_iota(jnp.int32, (nodes, nodes), 0)
    cols = lax.broadcasted_iota(jnp.int32, (nodes, nodes), 1)
    A = A + jnp.where(rows == cols, gama_b * Ad + 1.0, 0.0)

    # normalized Laplacian: A is symmetric, so row sums == column sums
    dis_col = lax.rsqrt(jnp.sum(A, axis=1, keepdims=True) + 1e-5)   # (N, 1)
    dis_row = lax.rsqrt(jnp.sum(A, axis=0, keepdims=True) + 1e-5)   # (1, N)
    a_ref[0] = (dis_col * A * dis_row).astype(a_ref.dtype)

    # per-batch scalars packed in one lane row: lane 0 -> gama_b, lane 1 -> sum_log_b
    lane = lax.broadcasted_iota(jnp.int32, (1, 128), 1)
    stats_ref[0] = (jnp.where(lane == 0, gama_b, 0.0)
                    + jnp.where(lane == 1, sum_log_b, 0.0))


# ----------------------------------------------------------------------------
# Wrapper
# ----------------------------------------------------------------------------
def scg_block_forward(x, params, *, hidden_ch, node_size, add_diag=True):
    assert add_diag, "kernel implements add_diag=True (module default)"
    B, C, H, W = x.shape
    nh, nw = node_size
    N = nh * nw
    hd = hidden_ch
    assert H % nh == 0 and W % nw == 0

    # ---- glue: adaptive average pool (exact window division) ----
    gx = x.reshape(B, C, nh, H // nh, nw, W // nw).mean(axis=(3, 5))  # (B, C, nh, nw)

    # ---- glue: zero-pad ring (for the 3x3 conv) and flatten; over-pad the flat
    #      axis by `pad` zeros per side so every tap offset is a contiguous slice.
    nwp = nw + 2
    Mp = (nh + 2) * nwp
    pad = nwp + 1                                          # max |tap offset|
    gxp = jnp.pad(gx, ((0, 0), (0, 0), (1, 1), (1, 1))).reshape(B, C, Mp)
    gpf = jnp.pad(gxp, ((0, 0), (0, 0), (pad, pad)))       # (B, C, Mp + 2*pad)

    # interior-position mask over the padded-flat layout (compile-time constant)
    rr = jnp.arange(Mp) // nwp
    cc = jnp.arange(Mp) % nwp
    mask = (((rr >= 1) & (rr <= nh) & (cc >= 1) & (cc <= nw))
            .astype(jnp.float32).reshape(1, Mp))

    # weights: 9 taps of (hd, C), biases as columns
    w3_taps = jnp.transpose(params["w3"], (2, 3, 0, 1)).reshape(9, hd, C)
    b3 = params["b3"].reshape(hd, 1)
    w1 = params["w1"].reshape(hd, C)
    b1 = params["b1"].reshape(hd, 1)

    # ---- Pallas: convs + log_var-side math (one grid step per batch) ----
    mu_p, zhat_p, kl_row = pl.pallas_call(
        functools.partial(_conv_kernel, mp=Mp, pad=pad, nwp=nwp),
        out_shape=(jax.ShapeDtypeStruct((B, hd, Mp), jnp.float32),
                   jax.ShapeDtypeStruct((B, hd, Mp), jnp.float32),
                   jax.ShapeDtypeStruct((B, 1, 128), jnp.float32)),
        grid=(B,),
        in_specs=[pl.BlockSpec((1, C, Mp + 2 * pad), lambda b: (b, 0, 0)),
                  pl.BlockSpec((1, Mp), lambda b: (0, 0)),
                  pl.BlockSpec((9, hd, C), lambda b: (0, 0, 0)),
                  pl.BlockSpec((hd, 1), lambda b: (0, 0)),
                  pl.BlockSpec((hd, C), lambda b: (0, 0)),
                  pl.BlockSpec((hd, 1), lambda b: (0, 0))],
        out_specs=(pl.BlockSpec((1, hd, Mp), lambda b: (b, 0, 0)),
                   pl.BlockSpec((1, hd, Mp), lambda b: (b, 0, 0)),
                   pl.BlockSpec((1, 1, 128), lambda b: (b, 0, 0))),
        compiler_params=pltpu.CompilerParams(dimension_semantics=("parallel",)),
    )(gpf, mask, w3_taps, b3, w1, b1)

    # ---- glue: extract interior, then the PyTorch flat NCHW reshape to (B,N,hd) ----
    mu_img = mu_p.reshape(B, hd, nh + 2, nw + 2)[:, :, 1:-1, 1:-1]     # (B, hd, nh, nw)
    z = mu_img.reshape(B, N, hd)                                       # quirky flat view
    zhat_img = zhat_p.reshape(B, hd, nh + 2, nw + 2)[:, :, 1:-1, 1:-1]
    zhat_base = zhat_img.reshape(B, N, hd)

    # ---- Pallas: graph construction, dl-loss partials, Laplacian ----
    A_lap, stats = pl.pallas_call(
        _graph_kernel,
        out_shape=(jax.ShapeDtypeStruct((B, N, N), jnp.float32),
                   jax.ShapeDtypeStruct((B, 1, 128), jnp.float32)),
        grid=(B,),
        in_specs=[pl.BlockSpec((1, N, hd), lambda b: (b, 0, 0))],
        out_specs=(pl.BlockSpec((1, N, N), lambda b: (b, 0, 0)),
                   pl.BlockSpec((1, 1, 128), lambda b: (b, 0, 0))),
        compiler_params=pltpu.CompilerParams(dimension_semantics=("parallel",)),
    )(z)

    # ---- glue: combine per-batch scalars into the final losses / scales ----
    gama = stats[:, 0, 0]                                  # (B,)
    sum_log = jnp.sum(stats[:, 0, 1])                      # sum over all diag entries < 1
    kl_sum = jnp.sum(kl_row[:, 0, 0])
    gama_mean = jnp.mean(gama)

    dl_loss = gama_mean * sum_log / (B * N * N)
    kl_loss = (-0.5 / N) * (kl_sum / (B * N))
    loss = kl_loss - dl_loss

    z_hat = gama_mean * zhat_base                          # (B, N, hidden)
    return A_lap, gx, loss, z_hat


if __name__ == "__main__":
    key = jax.random.PRNGKey(0)
    kx, k1, k2, k3, k4 = jax.random.split(key, 5)

    B, C, H, W = 2, 4, 16, 16
    hidden_ch = 8
    node_size = (8, 8)

    x = jax.random.normal(kx, (B, C, H, W), jnp.float32)
    params = {
        "w3": jax.random.normal(k1, (hidden_ch, C, 3, 3), jnp.float32) * 0.1,
        "b3": jax.random.normal(k2, (hidden_ch,), jnp.float32) * 0.1,
        "w1": jax.random.normal(k3, (hidden_ch, C, 1, 1), jnp.float32) * 0.1,
        "b1": jax.random.normal(k4, (hidden_ch,), jnp.float32) * 0.1,
    }

    A, gx, loss, z_hat = scg_block_forward(
        x, params, hidden_ch=hidden_ch, node_size=node_size, add_diag=True)
    jax.tree_util.tree_map(jax.block_until_ready, (A, gx, loss, z_hat))

    N = node_size[0] * node_size[1]
    assert A.shape == (B, N, N)
    assert gx.shape == (B, C, node_size[0], node_size[1])
    assert z_hat.shape == (B, N, hidden_ch)
    assert loss.shape == ()
    print("KERNEL_OK")
</pallas_src>

<mosaic_0001>
module attributes {stable_mosaic.version = 11 : i64} {
  func.func @_conv_kernel(%arg0: i32, %arg1: memref<1x4x122xf32, #tpu.memory_space<vmem>>, %arg2: memref<1x100xf32, #tpu.memory_space<vmem>>, %arg3: memref<9x8x4xf32, #tpu.memory_space<vmem>>, %arg4: memref<8x1xf32, #tpu.memory_space<vmem>>, %arg5: memref<8x4xf32, #tpu.memory_space<vmem>>, %arg6: memref<8x1xf32, #tpu.memory_space<vmem>>, %arg7: memref<1x8x100xf32, #tpu.memory_space<vmem>>, %arg8: memref<1x8x100xf32, #tpu.memory_space<vmem>>, %arg9: memref<1x1x128xf32, #tpu.memory_space<vmem>>) attributes {dimension_semantics = [#tpu.dimension_semantics<parallel>], iteration_bounds = array<i64: 2>, scalar_prefetch = 0 : i64, scratch_operands = 0 : i64, tpu.core_type = #tpu.core_type<tc>, window_params = [{transform_indices = @transform_0, window_bounds = array<i64: 1, 4, 122>}, {pipeline_mode = #tpu.pipeline_mode<synchronous>, transform_indices = @transform_1, window_bounds = array<i64: 1, 100>}, {pipeline_mode = #tpu.pipeline_mode<synchronous>, transform_indices = @transform_2, window_bounds = array<i64: 9, 8, 4>}, {pipeline_mode = #tpu.pipeline_mode<synchronous>, transform_indices = @transform_3, window_bounds = array<i64: 8, 1>}, {pipeline_mode = #tpu.pipeline_mode<synchronous>, transform_indices = @transform_4, window_bounds = array<i64: 8, 4>}, {pipeline_mode = #tpu.pipeline_mode<synchronous>, transform_indices = @transform_5, window_bounds = array<i64: 8, 1>}, {transform_indices = @transform_6, window_bounds = array<i64: 1, 8, 100>}, {transform_indices = @transform_7, window_bounds = array<i64: 1, 8, 100>}, {transform_indices = @transform_8, window_bounds = array<i64: 1, 1, 128>}]} {
    %c0 = arith.constant 0 : index
    %c0_0 = arith.constant 0 : index
    %0 = vector.load %arg2[%c0, %c0_0] : memref<1x100xf32, #tpu.memory_space<vmem>>, vector<1x100xf32>
    %cst = arith.constant 0.000000e+00 : f32
    %1 = vector.broadcast %cst : f32 to vector<8x100xf32>
    %c0_1 = arith.constant 0 : index
    %c0_2 = arith.constant 0 : index
    %c0_3 = arith.constant 0 : index
    %2 = vector.load %arg1[%c0_1, %c0_2, %c0_3] : memref<1x4x122xf32, #tpu.memory_space<vmem>>, vector<1x4x100xf32>
    %3 = vector.shape_cast %2 : vector<1x4x100xf32> to vector<4x100xf32>
    %c0_4 = arith.constant 0 : index
    %c0_5 = arith.constant 0 : index
    %c0_6 = arith.constant 0 : index
    %4 = vector.load %arg3[%c0_4, %c0_5, %c0_6] : memref<9x8x4xf32, #tpu.memory_space<vmem>>, vector<1x8x4xf32>
    %5 = vector.shape_cast %4 : vector<1x8x4xf32> to vector<8x4xf32>
    %cst_7 = arith.constant dense<0.000000e+00> : vector<8x100xf32>
    %6 = tpu.matmul %5, %3, %cst_7 {dimension_numbers = #tpu.dot_dimension_numbers<[1], [0], [0], [1], [0, 0, 1, 1], [], []>} : vector<8x4xf32>, vector<4x100xf32>, vector<8x100xf32> -> vector<8x100xf32>
    %7 = arith.addf %1, %6 : vector<8x100xf32>
    %c0_8 = arith.constant 0 : index
    %c0_9 = arith.constant 0 : index
    %c1 = arith.constant 1 : index
    %8 = vector.load %arg1[%c0_8, %c0_9, %c1] : memref<1x4x122xf32, #tpu.memory_space<vmem>>, vector<1x4x100xf32>
    %9 = vector.shape_cast %8 : vector<1x4x100xf32> to vector<4x100xf32>
    %c1_10 = arith.constant 1 : index
    %c0_11 = arith.constant 0 : index
    %c0_12 = arith.constant 0 : index
    %10 = vector.load %arg3[%c1_10, %c0_11, %c0_12] : memref<9x8x4xf32, #tpu.memory_space<vmem>>, vector<1x8x4xf32>
    %11 = vector.shape_cast %10 : vector<1x8x4xf32> to vector<8x4xf32>
    %cst_13 = arith.constant dense<0.000000e+00> : vector<8x100xf32>
    %12 = tpu.matmul %11, %9, %cst_13 {dimension_numbers = #tpu.dot_dimension_numbers<[1], [0], [0], [1], [0, 0, 1, 1], [], []>} : vector<8x4xf32>, vector<4x100xf32>, vector<8x100xf32> -> vector<8x100xf32>
    %13 = arith.addf %7, %12 : vector<8x100xf32>
    %c0_14 = arith.constant 0 : index
    %c0_15 = arith.constant 0 : index
    %c2 = arith.constant 2 : index
    %14 = vector.load %arg1[%c0_14, %c0_15, %c2] : memref<1x4x122xf32, #tpu.memory_space<vmem>>, vector<1x4x100xf32>
    %15 = vector.shape_cast %14 : vector<1x4x100xf32> to vector<4x100xf32>
    %c2_16 = arith.constant 2 : index
    %c0_17 = arith.constant 0 : index
    %c0_18 = arith.constant 0 : index
    %16 = vector.load %arg3[%c2_16, %c0_17, %c0_18] : memref<9x8x4xf32, #tpu.memory_space<vmem>>, vector<1x8x4xf32>
    %17 = vector.shape_cast %16 : vector<1x8x4xf32> to vector<8x4xf32>
    %cst_19 = arith.constant dense<0.000000e+00> : vector<8x100xf32>
    %18 = tpu.matmul %17, %15, %cst_19 {dimension_numbers = #tpu.dot_dimension_numbers<[1], [0], [0], [1], [0, 0, 1, 1], [], []>} : vector<8x4xf32>, vector<4x100xf32>, vector<8x100xf32> -> vector<8x100xf32>
    %19 = arith.addf %13, %18 : vector<8x100xf32>
    %c0_20 = arith.constant 0 : index
    %c0_21 = arith.constant 0 : index
    %c10 = arith.constant 10 : index
    %20 = vector.load %arg1[%c0_20, %c0_21, %c10] : memref<1x4x122xf32, #tpu.memory_space<vmem>>, vector<1x4x100xf32>
    %21 = vector.shape_cast %20 : vector<1x4x100xf32> to vector<4x100xf32>
    %c3 = arith.constant 3 : index
    %c0_22 = arith.constant 0 : index
    %c0_23 = arith.constant 0 : index
    %22 = vector.load %arg3[%c3, %c0_22, %c0_23] : memref<9x8x4xf32, #tpu.memory_space<vmem>>, vector<1x8x4xf32>
    %23 = vector.shape_cast %22 : vector<1x8x4xf32> to vector<8x4xf32>
    %cst_24 = arith.constant dense<0.000000e+00> : vector<8x100xf32>
    %24 = tpu.matmul %23, %21, %cst_24 {dimension_numbers = #tpu.dot_dimension_numbers<[1], [0], [0], [1], [0, 0, 1, 1], [], []>} : vector<8x4xf32>, vector<4x100xf32>, vector<8x100xf32> -> vector<8x100xf32>
    %25 = arith.addf %19, %24 : vector<8x100xf32>
    %c0_25 = arith.constant 0 : index
    %c0_26 = arith.constant 0 : index
    %c11 = arith.constant 11 : index
    %26 = vector.load %arg1[%c0_25, %c0_26, %c11] : memref<1x4x122xf32, #tpu.memory_space<vmem>>, vector<1x4x100xf32>
    %27 = vector.shape_cast %26 : vector<1x4x100xf32> to vector<4x100xf32>
    %c4 = arith.constant 4 : index
    %c0_27 = arith.constant 0 : index
    %c0_28 = arith.constant 0 : index
    %28 = vector.load %arg3[%c4, %c0_27, %c0_28] : memref<9x8x4xf32, #tpu.memory_space<vmem>>, vector<1x8x4xf32>
    %29 = vector.shape_cast %28 : vector<1x8x4xf32> to vector<8x4xf32>
    %cst_29 = arith.constant dense<0.000000e+00> : vector<8x100xf32>
    %30 = tpu.matmul %29, %27, %cst_29 {dimension_numbers = #tpu.dot_dimension_numbers<[1], [0], [0], [1], [0, 0, 1, 1], [], []>} : vector<8x4xf32>, vector<4x100xf32>, vector<8x100xf32> -> vector<8x100xf32>
    %31 = arith.addf %25, %30 : vector<8x100xf32>
    %c0_30 = arith.constant 0 : index
    %c0_31 = arith.constant 0 : index
    %c12 = arith.constant 12 : index
    %32 = vector.load %arg1[%c0_30, %c0_31, %c12] : memref<1x4x122xf32, #tpu.memory_space<vmem>>, vector<1x4x100xf32>
    %33 = vector.shape_cast %32 : vector<1x4x100xf32> to vector<4x100xf32>
    %c5 = arith.constant 5 : index
    %c0_32 = arith.constant 0 : index
    %c0_33 = arith.constant 0 : index
    %34 = vector.load %arg3[%c5, %c0_32, %c0_33] : memref<9x8x4xf32, #tpu.memory_space<vmem>>, vector<1x8x4xf32>
    %35 = vector.shape_cast %34 : vector<1x8x4xf32> to vector<8x4xf32>
    %cst_34 = arith.constant dense<0.000000e+00> : vector<8x100xf32>
    %36 = tpu.matmul %35, %33, %cst_34 {dimension_numbers = #tpu.dot_dimension_numbers<[1], [0], [0], [1], [0, 0, 1, 1], [], []>} : vector<8x4xf32>, vector<4x100xf32>, vector<8x100xf32> -> vector<8x100xf32>
    %37 = arith.addf %31, %36 : vector<8x100xf32>
    %c0_35 = arith.constant 0 : index
    %c0_36 = arith.constant 0 : index
    %c20 = arith.constant 20 : index
    %38 = vector.load %arg1[%c0_35, %c0_36, %c20] : memref<1x4x122xf32, #tpu.memory_space<vmem>>, vector<1x4x100xf32>
    %39 = vector.shape_cast %38 : vector<1x4x100xf32> to vector<4x100xf32>
    %c6 = arith.constant 6 : index
    %c0_37 = arith.constant 0 : index
    %c0_38 = arith.constant 0 : index
    %40 = vector.load %arg3[%c6, %c0_37, %c0_38] : memref<9x8x4xf32, #tpu.memory_space<vmem>>, vector<1x8x4xf32>
    %41 = vector.shape_cast %40 : vector<1x8x4xf32> to vector<8x4xf32>
    %cst_39 = arith.constant dense<0.000000e+00> : vector<8x100xf32>
    %42 = tpu.matmul %41, %39, %cst_39 {dimension_numbers = #tpu.dot_dimension_numbers<[1], [0], [0], [1], [0, 0, 1, 1], [], []>} : vector<8x4xf32>, vector<4x100xf32>, vector<8x100xf32> -> vector<8x100xf32>
    %43 = arith.addf %37, %42 : vector<8x100xf32>
    %c0_40 = arith.constant 0 : index
    %c0_41 = arith.constant 0 : index
    %c21 = arith.constant 21 : index
    %44 = vector.load %arg1[%c0_40, %c0_41, %c21] : memref<1x4x122xf32, #tpu.memory_space<vmem>>, vector<1x4x100xf32>
    %45 = vector.shape_cast %44 : vector<1x4x100xf32> to vector<4x100xf32>
    %c7 = arith.constant 7 : index
    %c0_42 = arith.constant 0 : index
    %c0_43 = arith.constant 0 : index
    %46 = vector.load %arg3[%c7, %c0_42, %c0_43] : memref<9x8x4xf32, #tpu.memory_space<vmem>>, vector<1x8x4xf32>
    %47 = vector.shape_cast %46 : vector<1x8x4xf32> to vector<8x4xf32>
    %cst_44 = arith.constant dense<0.000000e+00> : vector<8x100xf32>
    %48 = tpu.matmul %47, %45, %cst_44 {dimension_numbers = #tpu.dot_dimension_numbers<[1], [0], [0], [1], [0, 0, 1, 1], [], []>} : vector<8x4xf32>, vector<4x100xf32>, vector<8x100xf32> -> vector<8x100xf32>
    %49 = arith.addf %43, %48 : vector<8x100xf32>
    %c0_45 = arith.constant 0 : index
    %c0_46 = arith.constant 0 : index
    %c22 = arith.constant 22 : index
    %50 = vector.load %arg1[%c0_45, %c0_46, %c22] : memref<1x4x122xf32, #tpu.memory_space<vmem>>, vector<1x4x100xf32>
    %51 = vector.shape_cast %50 : vector<1x4x100xf32> to vector<4x100xf32>
    %c8 = arith.constant 8 : index
    %c0_47 = arith.constant 0 : index
    %c0_48 = arith.constant 0 : index
    %52 = vector.load %arg3[%c8, %c0_47, %c0_48] : memref<9x8x4xf32, #tpu.memory_space<vmem>>, vector<1x8x4xf32>
    %53 = vector.shape_cast %52 : vector<1x8x4xf32> to vector<8x4xf32>
    %cst_49 = arith.constant dense<0.000000e+00> : vector<8x100xf32>
    %54 = tpu.matmul %53, %51, %cst_49 {dimension_numbers = #tpu.dot_dimension_numbers<[1], [0], [0], [1], [0, 0, 1, 1], [], []>} : vector<8x4xf32>, vector<4x100xf32>, vector<8x100xf32> -> vector<8x100xf32>
    %55 = arith.addf %49, %54 : vector<8x100xf32>
    %c0_50 = arith.constant 0 : index
    %c0_51 = arith.constant 0 : index
    %56 = vector.load %arg4[%c0_50, %c0_51] : memref<8x1xf32, #tpu.memory_space<vmem>>, vector<8x1xf32>
    %57 = vector.broadcast %56 : vector<8x1xf32> to vector<8x100xf32>
    %58 = arith.addf %55, %57 : vector<8x100xf32>
    %c0_52 = arith.constant 0 : index
    %c0_53 = arith.constant 0 : index
    %c11_54 = arith.constant 11 : index
    %59 = vector.load %arg1[%c0_52, %c0_53, %c11_54] : memref<1x4x122xf32, #tpu.memory_space<vmem>>, vector<1x4x100xf32>
    %60 = vector.shape_cast %59 : vector<1x4x100xf32> to vector<4x100xf32>
    %c0_55 = arith.constant 0 : index
    %c0_56 = arith.constant 0 : index
    %61 = vector.load %arg5[%c0_55, %c0_56] : memref<8x4xf32, #tpu.memory_space<vmem>>, vector<8x4xf32>
    %cst_57 = arith.constant dense<0.000000e+00> : vector<8x100xf32>
    %62 = tpu.matmul %61, %60, %cst_57 {dimension_numbers = #tpu.dot_dimension_numbers<[1], [0], [0], [1], [0, 0, 1, 1], [], []>} : vector<8x4xf32>, vector<4x100xf32>, vector<8x100xf32> -> vector<8x100xf32>
    %c0_58 = arith.constant 0 : index
    %c0_59 = arith.constant 0 : index
    %63 = vector.load %arg6[%c0_58, %c0_59] : memref<8x1xf32, #tpu.memory_space<vmem>>, vector<8x1xf32>
    %64 = vector.broadcast %63 : vector<8x1xf32> to vector<8x100xf32>
    %65 = arith.addf %62, %64 : vector<8x100xf32>
    %cst_60 = arith.constant 2.000000e+00 : f32
    %66 = vector.broadcast %cst_60 : f32 to vector<8x100xf32>
    %67 = arith.mulf %66, %65 : vector<8x100xf32>
    %cst_61 = arith.constant 1.000000e+00 : f32
    %68 = vector.broadcast %cst_61 : f32 to vector<8x100xf32>
    %69 = arith.addf %68, %67 : vector<8x100xf32>
    %70 = arith.mulf %58, %58 : vector<8x100xf32>
    %71 = arith.subf %69, %70 : vector<8x100xf32>
    %cst_62 = arith.constant 2.000000e+00 : f32
    %72 = vector.broadcast %cst_62 : f32 to vector<8x100xf32>
    %73 = arith.mulf %72, %65 : vector<8x100xf32>
    %74 = math.exp %73 : vector<8x100xf32>
    %75 = arith.subf %71, %74 : vector<8x100xf32>
    %76 = vector.broadcast %0 : vector<1x100xf32> to vector<8x100xf32>
    %77 = arith.mulf %75, %76 : vector<8x100xf32>
    %78 = vector.shape_cast %77 : vector<8x100xf32> to vector<1x8x100xf32>
    %cst_63 = arith.constant dense<0.000000e+00> : vector<1xf32>
    %79 = vector.multi_reduction <add>, %78, %cst_63 [1, 2] : vector<1x8x100xf32> to vector<1xf32>
    %80 = vector.shape_cast %79 : vector<1xf32> to vector<1x1x1xf32>
    %81 = vector.extract %80[0, 0, 0] : f32 from vector<1x1x1xf32>
    %c0_64 = arith.constant 0 : index
    %c0_65 = arith.constant 0 : index
    %c0_66 = arith.constant 0 : index
    %82 = vector.load %arg7[%c0_64, %c0_65, %c0_66] : memref<1x8x100xf32, #tpu.memory_space<vmem>>, vector<1x8x100xf32>
    %83 = vector.shape_cast %82 : vector<1x8x100xf32> to vector<8x100xf32>
    %84 = vector.shape_cast %58 : vector<8x100xf32> to vector<1x8x100xf32>
    tpu.vector_store %arg7[%c0_64, %c0_65, %c0_66], %84 {strides = array<i32>} : memref<1x8x100xf32, #tpu.memory_space<vmem>>, vector<1x8x100xf32>,
    %cst_67 = arith.constant 1.000000e+00 : f32
    %85 = vector.broadcast %cst_67 : f32 to vector<8x100xf32>
    %86 = arith.subf %85, %65 : vector<8x100xf32>
    %87 = arith.mulf %58, %86 : vector<8x100xf32>
    %c0_68 = arith.constant 0 : index
    %c0_69 = arith.constant 0 : index
    %c0_70 = arith.constant 0 : index
    %88 = vector.load %arg8[%c0_68, %c0_69, %c0_70] : memref<1x8x100xf32, #tpu.memory_space<vmem>>, vector<1x8x100xf32>
    %89 = vector.shape_cast %88 : vector<1x8x100xf32> to vector<8x100xf32>
    %90 = vector.shape_cast %87 : vector<8x100xf32> to vector<1x8x100xf32>
    tpu.vector_store %arg8[%c0_68, %c0_69, %c0_70], %90 {strides = array<i32>} : memref<1x8x100xf32, #tpu.memory_space<vmem>>, vector<1x8x100xf32>,
    %91 = vector.broadcast %81 : f32 to vector<1x128xf32>
    %c0_71 = arith.constant 0 : index
    %c0_72 = arith.constant 0 : index
    %c0_73 = arith.constant 0 : index
    %92 = vector.load %arg9[%c0_71, %c0_72, %c0_73] : memref<1x1x128xf32, #tpu.memory_space<vmem>>, vector<1x1x128xf32>
    %93 = vector.shape_cast %92 : vector<1x1x128xf32> to vector<1x128xf32>
    %94 = vector.shape_cast %91 : vector<1x128xf32> to vector<1x1x128xf32>
    tpu.vector_store %arg9[%c0_71, %c0_72, %c0_73], %94 {strides = array<i32>} : memref<1x1x128xf32, #tpu.memory_space<vmem>>, vector<1x1x128xf32>,
    return
  }
  func.func @transform_0(%arg0: i32) -> (i32, i32, i32) {
    %c0_i32 = arith.constant 0 : i32
    %c0_i32_0 = arith.constant 0 : i32
    %c0_i32_1 = arith.constant 0 : i32
    return %arg0, %c0_i32, %c0_i32_0 : i32, i32, i32
  }
  func.func @transform_1(%arg0: i32) -> (i32, i32) {
    %c0_i32 = arith.constant 0 : i32
    %c0_i32_0 = arith.constant 0 : i32
    %c0_i32_1 = arith.constant 0 : i32
    return %c0_i32, %c0_i32_0 : i32, i32
  }
  func.func @transform_2(%arg0: i32) -> (i32, i32, i32) {
    %c0_i32 = arith.constant 0 : i32
    %c0_i32_0 = arith.constant 0 : i32
    %c0_i32_1 = arith.constant 0 : i32
    %c0_i32_2 = arith.constant 0 : i32
    return %c0_i32, %c0_i32_0, %c0_i32_1 : i32, i32, i32
  }
  func.func @transform_3(%arg0: i32) -> (i32, i32) {
    %c0_i32 = arith.constant 0 : i32
    %c0_i32_0 = arith.constant 0 : i32
    %c0_i32_1 = arith.constant 0 : i32
    return %c0_i32, %c0_i32_0 : i32, i32
  }
  func.func @transform_4(%arg0: i32) -> (i32, i32) {
    %c0_i32 = arith.constant 0 : i32
    %c0_i32_0 = arith.constant 0 : i32
    %c0_i32_1 = arith.constant 0 : i32
    return %c0_i32, %c0_i32_0 : i32, i32
  }
  func.func @transform_5(%arg0: i32) -> (i32, i32) {
    %c0_i32 = arith.constant 0 : i32
    %c0_i32_0 = arith.constant 0 : i32
    %c0_i32_1 = arith.constant 0 : i32
    return %c0_i32, %c0_i32_0 : i32, i32
  }
  func.func @transform_6(%arg0: i32) -> (i32, i32, i32) {
    %c0_i32 = arith.constant 0 : i32
    %c0_i32_0 = arith.constant 0 : i32
    %c0_i32_1 = arith.constant 0 : i32
    return %arg0, %c0_i32, %c0_i32_0 : i32, i32, i32
  }
  func.func @transform_7(%arg0: i32) -> (i32, i32, i32) {
    %c0_i32 = arith.constant 0 : i32
    %c0_i32_0 = arith.constant 0 : i32
    %c0_i32_1 = arith.constant 0 : i32
    return %arg0, %c0_i32, %c0_i32_0 : i32, i32, i32
  }
  func.func @transform_8(%arg0: i32) -> (i32, i32, i32) {
    %c0_i32 = arith.constant 0 : i32
    %c0_i32_0 = arith.constant 0 : i32
    %c0_i32_1 = arith.constant 0 : i32
    return %arg0, %c0_i32, %c0_i32_0 : i32, i32, i32
  }
}

</mosaic_0001>

<llo_original>
// kernel: tpu_custom_call.1
$region0: #{tpu_custom_call.1}
  #allocation0 [shape = 'u32[]', space=smem, size = 0x4, offset = 0x4, fixed_abs, tag = 'smem constant byte address 0x4 - core index']
  #allocation1 [shape = 'u32[144,128]{1,0:T(1,128)}', space=vmem, size = 0x12000, scoped, tag = 'internal scratch']
  %s0 = inlined_call_operand.vmem [shape: f32[2,4,122], index: 0, kind: input, shape index: {}]
  %s1 = inlined_call_operand.vmem [shape: f32[1,100], index: 1, kind: input, shape index: {}]
  %s2 = inlined_call_operand.vmem [shape: f32[9,8,4], index: 2, kind: input, shape index: {}]
  %s3 = inlined_call_operand.vmem [shape: f32[8,1], index: 3, kind: input, shape index: {}]
  %s4 = inlined_call_operand.vmem [shape: f32[8,4], index: 4, kind: input, shape index: {}]
  %s5 = inlined_call_operand.vmem [shape: f32[8,1], index: 5, kind: input, shape index: {}]
  %s6 = inlined_call_operand.hbm [shape: f32[2,8,100], index: 6, kind: output, shape index: {0}]
  %s7 = inlined_call_operand.hbm [shape: f32[2,8,100], index: 7, kind: output, shape index: {1}]
  %s8 = inlined_call_operand.hbm [shape: f32[2,1,128], index: 8, kind: output, shape index: {2}]
  %9 = xla_tuple %s6, %s7, %s8
  %s10 = sld [smem:[#allocation0]]
  $region73: #{tpu_custom_call.1} parent=0
    _
  %s12 = ssub.s32 1, %s10
  %s13 = scalar_select 0, %s12, %s10
  $region1: #{tpu_custom_call.1} parent=0
    #allocation2 [shape = 'u8[8192]{0}', space=vmem, size = 0x2000, scoped, tag = 'output window, operand 0']
    #allocation3 [shape = 's32[2]{0}', space=sflag, size = 0x8, scoped, tag = 'scoped memory for tpu_custom_call.1']
    #allocation4 [shape = 'u8[8192]{0}', space=vmem, size = 0x2000, scoped, tag = 'output window, operand 1']
    #allocation5 [shape = 's32[2]{0}', space=sflag, size = 0x8, scoped, tag = 'scoped memory for tpu_custom_call.1']
    #allocation6 [shape = 'u8[1024]{0}', space=vmem, size = 0x400, scoped, tag = 'output window, operand 2']
    %14 = vsyncpa [#allocation3], 0
    %s15 = scalar_lea.sflag [#allocation3], 1
    %16 = vsyncpa %s15, 0
    %17 = vsyncpa [#allocation5], 0
    %s18 = scalar_lea.sflag [#allocation5], 1
    %19 = vsyncpa %s18, 0
    loop: start=0, step=1, limit=4
    $region2: #{tpu_custom_call.1} parent=1 // loop_pre_header
      _
    $region3: #{tpu_custom_call.1} parent=1 // loop_header
      %s21 = sphi 0, %s25
      %p22 = scmp.ge.s32.totalorder %s21, 4
      %s31 = sphi 0, %s33
      %s34 = sphi 0, %s31
      %s35 = sphi 0, %s34
      %s51 = sphi 0, %s35
      %s55 = sphi 0, %s55
      %s57 = sphi 0, %s55
      %s58 = sphi 0, %s57
      %s72 = sphi 0, %s58
      %s76 = sphi 0, %s76
      %s78 = sphi 0, %s76
      %s79 = sphi 0, %s78
      %s93 = sphi 0, %s79
      %s97 = sphi 0, %s97
      %s99 = sphi 0, %s97
      %s100 = sphi 0, %s99
      %s114 = sphi 0, %s100
      %s118 = sphi 0, %s118
      %s120 = sphi 0, %s118
      %s121 = sphi 0, %s120
      %s135 = sphi 0, %s121
      %s139 = sphi 0, %s139
      %s141 = sphi 0, %s139
      %s142 = sphi 0, %s141
      %s156 = sphi 0, %s142
      %s162 = sphi 0, %s164
      %s165 = sphi 0, %s162
      %s166 = sphi 0, %s165
      %s182 = sphi 0, %s166
      %s188 = sphi 0, %s190
      %s191 = sphi 0, %s188
      %s192 = sphi 0, %s191
      %s208 = sphi 0, %s192
      %s214 = sphi 0, %s216
      %s217 = sphi 0, %s214
      %s218 = sphi 0, %s217
      %s234 = sphi 0, %s218
    $region4: #{tpu_custom_call.1} parent=1 // loop_header_branch
      %24 = sbr.rel (%p22) target = $region8
    $region5: #{tpu_custom_call.1} parent=1 // loop_body
      %s26 = ssub.s32 %s21, 1
      %s27 = ssub.s32 %s21, 2
      %s28 = sadd.s32 %s21, 1
      %s29 = ssub.s32 %s21, %s28
      %p30 = scmp.eq.s32.totalorder %s29, 0
      %s32 = sadd.s32 %s31, 1
      %s33 = scalar_select %p30, %s31, %s32
      %p36 = pneg %p30
      %p37 = scmp.eq.s32.totalorder %s21, 1
      %p38 = por %p36, %p37
      %p39 = scmp.ne.s32.totalorder %s31, %s34
      %p40 = scmp.eq.s32.totalorder %s21, 0
      %p41 = por %p39, %p40
      %p42 = scmp.ne.s32.totalorder %s31, %s34
      %p43 = scmp.eq.s32.totalorder %s26, 1
      %p44 = por %p42, %p43
      %p45 = scmp.ne.s32.totalorder %s34, %s35
      %p46 = scmp.eq.s32.totalorder %s26, 0
      %p47 = por %p45, %p46
      %p48 = scmp.ne.s32.totalorder %s34, %s35
      %p49 = scmp.eq.s32.totalorder %s27, 1
      %p50 = por %p48, %p49
      %p52 = scmp.ne.s32.totalorder %s35, %s51
      %p53 = scmp.eq.s32.totalorder %s27, 0
      %p54 = por %p52, %p53
      %s56 = sadd.s32 %s55, 1
      %p59 = scmp.eq.s32.totalorder %s21, 1
      %p60 = scmp.ne.s32.totalorder %s55, %s57
      %p61 = scmp.eq.s32.totalorder %s21, 0
      %p62 = por %p60, %p61
      %p63 = scmp.ne.s32.totalorder %s55, %s57
      %p64 = scmp.eq.s32.totalorder %s26, 1
      %p65 = por %p63, %p64
      %p66 = scmp.ne.s32.totalorder %s57, %s58
      %p67 = scmp.eq.s32.totalorder %s26, 0
      %p68 = por %p66, %p67
      %p69 = scmp.ne.s32.totalorder %s57, %s58
      %p70 = scmp.eq.s32.totalorder %s27, 1
      %p71 = por %p69, %p70
      %p73 = scmp.ne.s32.totalorder %s58, %s72
      %p74 = scmp.eq.s32.totalorder %s27, 0
      %p75 = por %p73, %p74
      %s77 = sadd.s32 %s76, 1
      %p80 = scmp.eq.s32.totalorder %s21, 1
      %p81 = scmp.ne.s32.totalorder %s76, %s78
      %p82 = scmp.eq.s32.totalorder %s21, 0
      %p83 = por %p81, %p82
      %p84 = scmp.ne.s32.totalorder %s76, %s78
      %p85 = scmp.eq.s32.totalorder %s26, 1
      %p86 = por %p84, %p85
      %p87 = scmp.ne.s32.totalorder %s78, %s79
      %p88 = scmp.eq.s32.totalorder %s26, 0
      %p89 = por %p87, %p88
      %p90 = scmp.ne.s32.totalorder %s78, %s79
      %p91 = scmp.eq.s32.totalorder %s27, 1
      %p92 = por %p90, %p91
      %p94 = scmp.ne.s32.totalorder %s79, %s93
      %p95 = scmp.eq.s32.totalorder %s27, 0
      %p96 = por %p94, %p95
      %s98 = sadd.s32 %s97, 1
      %p101 = scmp.eq.s32.totalorder %s21, 1
      %p102 = scmp.ne.s32.totalorder %s97, %s99
      %p103 = scmp.eq.s32.totalorder %s21, 0
      %p104 = por %p102, %p103
      %p105 = scmp.ne.s32.totalorder %s97, %s99
      %p106 = scmp.eq.s32.totalorder %s26, 1
      %p107 = por %p105, %p106
      %p108 = scmp.ne.s32.totalorder %s99, %s100
      %p109 = scmp.eq.s32.totalorder %s26, 0
      %p110 = por %p108, %p109
      %p111 = scmp.ne.s32.totalorder %s99, %s100
      %p112 = scmp.eq.s32.totalorder %s27, 1
      %p113 = por %p111, %p112
      %p115 = scmp.ne.s32.totalorder %s100, %s114
      %p116 = scmp.eq.s32.totalorder %s27, 0
      %p117 = por %p115, %p116
      %s119 = sadd.s32 %s118, 1
      %p122 = scmp.eq.s32.totalorder %s21, 1
      %p123 = scmp.ne.s32.totalorder %s118, %s120
      %p124 = scmp.eq.s32.totalorder %s21, 0
      %p125 = por %p123, %p124
      %p126 = scmp.ne.s32.totalorder %s118, %s120
      %p127 = scmp.eq.s32.totalorder %s26, 1
      %p128 = por %p126, %p127
      %p129 = scmp.ne.s32.totalorder %s120, %s121
      %p130 = scmp.eq.s32.totalorder %s26, 0
      %p131 = por %p129, %p130
      %p132 = scmp.ne.s32.totalorder %s120, %s121
      %p133 = scmp.eq.s32.totalorder %s27, 1
      %p134 = por %p132, %p133
      %p136 = scmp.ne.s32.totalorder %s121, %s135
      %p137 = scmp.eq.s32.totalorder %s27, 0
      %p138 = por %p136, %p137
      %s140 = sadd.s32 %s139, 1
      %p143 = scmp.eq.s32.totalorder %s21, 1
      %p144 = scmp.ne.s32.totalorder %s139, %s141
      %p145 = scmp.eq.s32.totalorder %s21, 0
      %p146 = por %p144, %p145
      %p147 = scmp.ne.s32.totalorder %s139, %s141
      %p148 = scmp.eq.s32.totalorder %s26, 1
      %p149 = por %p147, %p148
      %p150 = scmp.ne.s32.totalorder %s141, %s142
      %p151 = scmp.eq.s32.totalorder %s26, 0
      %p152 = por %p150, %p151
      %p153 = scmp.ne.s32.totalorder %s141, %s142
      %p154 = scmp.eq.s32.totalorder %s27, 1
      %p155 = por %p153, %p154
      %p157 = scmp.ne.s32.totalorder %s142, %s156
      %p158 = scmp.eq.s32.totalorder %s27, 0
      %p159 = por %p157, %p158
      %s160 = ssub.s32 %s21, %s28
      %p161 = scmp.eq.s32.totalorder %s160, 0
      %s163 = sadd.s32 %s162, 1
      %s164 = scalar_select %p161, %s162, %s163
      %p167 = pneg %p161
      %p168 = scmp.eq.s32.totalorder %s21, 1
      %p169 = por %p167, %p168
      %p170 = scmp.ne.s32.totalorder %s162, %s165
      %p171 = scmp.eq.s32.totalorder %s21, 0
      %p172 = por %p170, %p171
      %p173 = scmp.ne.s32.totalorder %s162, %s165
      %p174 = scmp.eq.s32.totalorder %s26, 1
      %p175 = por %p173, %p174
      %p176 = scmp.ne.s32.totalorder %s165, %s166
      %p177 = scmp.eq.s32.totalorder %s26, 0
      %p178 = por %p176, %p177
      %p179 = scmp.ne.s32.totalorder %s165, %s166
      %p180 = scmp.eq.s32.totalorder %s27, 1
      %p181 = por %p179, %p180
      %p183 = scmp.ne.s32.totalorder %s166, %s182
      %p184 = scmp.eq.s32.totalorder %s27, 0
      %p185 = por %p183, %p184
      %s186 = ssub.s32 %s21, %s28
      %p187 = scmp.eq.s32.totalorder %s186, 0
      %s189 = sadd.s32 %s188, 1
      %s190 = scalar_select %p187, %s188, %s189
      %p193 = pneg %p187
      %p194 = scmp.eq.s32.totalorder %s21, 1
      %p195 = por %p193, %p194
      %p196 = scmp.ne.s32.totalorder %s188, %s191
      %p197 = scmp.eq.s32.totalorder %s21, 0
      %p198 = por %p196, %p197
      %p199 = scmp.ne.s32.totalorder %s188, %s191
      %p200 = scmp.eq.s32.totalorder %s26, 1
      %p201 = por %p199, %p200
      %p202 = scmp.ne.s32.totalorder %s191, %s192
      %p203 = scmp.eq.s32.totalorder %s26, 0
      %p204 = por %p202, %p203
      %p205 = scmp.ne.s32.totalorder %s191, %s192
      %p206 = scmp.eq.s32.totalorder %s27, 1
      %p207 = por %p205, %p206
      %p209 = scmp.ne.s32.totalorder %s192, %s208
      %p210 = scmp.eq.s32.totalorder %s27, 0
      %p211 = por %p209, %p210
      %s212 = ssub.s32 %s21, %s28
      %p213 = scmp.eq.s32.totalorder %s212, 0
      %s215 = sadd.s32 %s214, 1
      %s216 = scalar_select %p213, %s214, %s215
      %p219 = pneg %p213
      %p220 = scmp.eq.s32.totalorder %s21, 1
      %p221 = por %p219, %p220
      %p222 = scmp.ne.s32.totalorder %s214, %s217
      %p223 = scmp.eq.s32.totalorder %s21, 0
      %p224 = por %p222, %p223
      %p225 = scmp.ne.s32.totalorder %s214, %s217
      %p226 = scmp.eq.s32.totalorder %s26, 1
      %p227 = por %p225, %p226
      %p228 = scmp.ne.s32.totalorder %s217, %s218
      %p229 = scmp.eq.s32.totalorder %s26, 0
      %p230 = por %p228, %p229
      %p231 = scmp.ne.s32.totalorder %s217, %s218
      %p232 = scmp.eq.s32.totalorder %s27, 1
      %p233 = por %p231, %p232
      %p235 = scmp.ne.s32.totalorder %s218, %s234
      %p236 = scmp.eq.s32.totalorder %s27, 0
      %p237 = por %p235, %p236
      %p238 = scmp.le.s32.totalorder 1, %s21
      %p239 = scmp.lt.s32.totalorder %s21, 3
      %p240 = pnand %p238, %p239
      %p241 = pneg %p240
      // Predicated region
      $region9: #{tpu_custom_call.1} parent=5 // pred_check
        _
      $region10: #{tpu_custom_call.1} parent=5 // pred_check_branch
        %243 = sbr.rel (%p240) target = $region12
      $region11: #{tpu_custom_call.1} parent=5 // pred_region
        %s244 = ssub.s32 %s21, 1
        // Predicated region
        $region13: #{tpu_custom_call.1} parent=11 // pred_check
          %p245 = pneg %p68
        $region14: #{tpu_custom_call.1} parent=11 // pred_check_branch
          %247 = sbr.rel (%p245) target = $region16
        $region15: #{tpu_custom_call.1} parent=11 // pred_region
          _
        $region16: #{tpu_custom_call.1} parent=11 // pred_fallthru
          _
        // Predicated region
        $region17: #{tpu_custom_call.1} parent=11 // pred_check
          %p248 = pneg %p89
        $region18: #{tpu_custom_call.1} parent=11 // pred_check_branch
          %250 = sbr.rel (%p248) target = $region20
        $region19: #{tpu_custom_call.1} parent=11 // pred_region
          _
        $region20: #{tpu_custom_call.1} parent=11 // pred_fallthru
          _
        // Predicated region
        $region21: #{tpu_custom_call.1} parent=11 // pred_check
          %p251 = pneg %p110
        $region22: #{tpu_custom_call.1} parent=11 // pred_check_branch
          %253 = sbr.rel (%p251) target = $region24
        $region23: #{tpu_custom_call.1} parent=11 // pred_region
          _
        $region24: #{tpu_custom_call.1} parent=11 // pred_fallthru
          _
        // Predicated region
        $region25: #{tpu_custom_call.1} parent=11 // pred_check
          %p254 = pneg %p131
        $region26: #{tpu_custom_call.1} parent=11 // pred_check_branch
          %256 = sbr.rel (%p254) target = $region28
        $region27: #{tpu_custom_call.1} parent=11 // pred_region
          _
        $region28: #{tpu_custom_call.1} parent=11 // pred_fallthru
          _
        // Predicated region
        $region29: #{tpu_custom_call.1} parent=11 // pred_check
          %p257 = pneg %p152
        $region30: #{tpu_custom_call.1} parent=11 // pred_check_branch
          %259 = sbr.rel (%p257) target = $region32
        $region31: #{tpu_custom_call.1} parent=11 // pred_region
          _
        $region32: #{tpu_custom_call.1} parent=11 // pred_fallthru
          _
      $region12: #{tpu_custom_call.1} parent=5 // pred_fallthru
        _
      %p260 = scmp.lt.s32.totalorder %s21, 2
      // Predicated region
      $region33: #{tpu_custom_call.1} parent=5 // pred_check
        %p261 = pneg %p260
      $region34: #{tpu_custom_call.1} parent=5 // pred_check_branch
        %263 = sbr.rel (%p261) target = $region36
      $region35: #{tpu_custom_call.1} parent=5 // pred_region
        // Predicated region
        $region37: #{tpu_custom_call.1} parent=35 // pred_check
          %p264 = pneg %p41
        $region38: #{tpu_custom_call.1} parent=35 // pred_check_branch
          %266 = sbr.rel (%p264) target = $region40
        $region39: #{tpu_custom_call.1} parent=35 // pred_region
          %p267 = scmp.lt.s32.totalorder %s21, 1
          %s268 = scalar_select %p267, %s21, 1
          %s269 = smul.addr %s268, 4
          %s270 = scalar_lea.vmem %s0, %s269
        $region40: #{tpu_custom_call.1} parent=35 // pred_fallthru
          _
      $region36: #{tpu_custom_call.1} parent=5 // pred_fallthru
        _
      %p271 = scmp.le.s32.totalorder 1, %s21
      %p272 = scmp.lt.s32.totalorder %s21, 3
      %p273 = pnand %p271, %p272
      %p274 = pneg %p273
      // Predicated region
      $region41: #{tpu_custom_call.1} parent=5 // pred_check
        _
      $region42: #{tpu_custom_call.1} parent=5 // pred_check_branch
        %276 = sbr.rel (%p273) target = $region44
      $region43: #{tpu_custom_call.1} parent=5 // pred_region
        %s277 = ssub.s32 %s21, 1
        %p278 = scmp.lt.s32.totalorder %s26, 1
        %s279 = scalar_select %p278, %s26, 1
        %s280 = smul.addr %s279, 4
        %s281 = scalar_lea.vmem %s0, %s280
        %p282 = pneg %p47
        %p283 = pneg %p44
        %p284 = pneg %p68
        %p285 = pneg %p65
        %p286 = pneg %p89
        %p287 = pneg %p86
        %p288 = pneg %p110
        %p289 = pneg %p107
        %p290 = pneg %p131
        %p291 = pneg %p128
        %p292 = pneg %p152
        %p293 = pneg %p149
        %p294 = pneg %p178
        %p295 = pneg %p175
        %s296 = sand.u32 %s165, 1
        %s297 = scalar_lea.sflag [#allocation3], %s296
        %s298 = sand.u32 %s165, 1
        %s299 = smul.addr %s298, 8
        %s300 = scalar_lea.vmem [#allocation2], %s299
        %p301 = pneg %p204
        %p302 = pneg %p201
        %s303 = sand.u32 %s26, 1
        %s304 = scalar_lea.sflag [#allocation5], %s303
        %s305 = sand.u32 %s191, 1
        %s306 = smul.addr %s305, 8
        %s307 = scalar_lea.vmem [#allocation4], %s306
        %p308 = pneg %p230
        %p309 = pneg %p227
        %s310 = sand.u32 %s26, 1
        %s311 = scalar_lea.sflag [#allocation5], %s310
        %s312 = sand.u32 %s217, 1
        %s313 = scalar_lea.vmem [#allocation6], %s312
        %p314 = scmp.lt.s32.totalorder %s26, 1
        %s315 = scalar_select %p314, %s26, 1
        %s316 = smul.addr %s315, 4
        %s317 = scalar_lea.vmem %s0, %s316
        %v318 = vld [vmem:[%s1] sm:$0x1]
        %v319 = vld [vmem:[%s317] sm:$0xf]
        %v320 = vld [vmem:[%s2] sm:$0xff]
        %s321 = scalar_lea.vmem %s2, 8
        %v322 = vld [vmem:[%s321] sm:$0xff]
        %324 = vrot.lane.b32.xlu0 %v319, 127
        %v325 = vpop.permute.xlu0 %324
        %vm326 = vcmask 31744
        %v328 = vsel %vm326, %v322, 0
        %vm330 = vcmask 1043456
        %v331 = vsel %vm330, %v325, 0
        %333 = vmatprep.subr.mxu0 0.0
        %334 = vmatpush1.msra.mxu0 %v331
        %335 = vmatprep.subr.mxu0 0.0
        %336 = vmatpush1.msra.mxu0 0.0
        %337 = vmatprep.subr.mxu0 0.0
        %338 = vmatpush1.msra.mxu0 0.0
        %339 = vmatprep.subr.mxu0 0.0
        %340 = vmatpush1.msra.mxu0 0.0
        %341 = vmatprep.subr.mxu0 0.0
        %342 = vmatpush1.msra.mxu0 0.0
        %343 = vmatprep.subr.mxu0 0.0
        %344 = vmatpush1.msra.mxu0 0.0
        %345 = vmatprep.subr.mxu0 0.0
        %346 = vmatpush1.msra.mxu0 0.0
        %347 = vmatprep.subr.mxu0 0.0
        %348 = vmatpush1.msra.mxu0 0.0
        %349 = vmatprep.subr.mxu0 0.0
        %350 = vmatpush1.msra.mxu0 0.0
        %351 = vmatprep.subr.mxu0 0.0
        %352 = vmatpush1.msra.mxu0 0.0
        %353 = vmatprep.subr.mxu0 0.0
        %354 = vmatpush1.msra.mxu0 0.0
        %355 = vmatprep.subr.mxu0 0.0
        %356 = vmatpush1.msra.mxu0 0.0
        %357 = vmatprep.subr.mxu0 0.0
        %358 = vmatpush1.msra.mxu0 0.0
        %359 = vmatprep.subr.mxu0 0.0
        %360 = vmatpush1.msra.mxu0 0.0
        %361 = vmatprep.subr.mxu0 0.0
        %362 = vmatpush1.msra.mxu0 0.0
        %363 = vmatprep.subr.mxu0 0.0
        %364 = vmatpush1.msra.mxu0 0.0
        %365 = vmatprep.subr.mxu0 0.0
        %366 = vmatpush1.msra.mxu0 0.0
        %367 = vmatprep.subr.mxu0 0.0
        %368 = vmatpush1.msra.mxu0 0.0
        %369 = vmatprep.subr.mxu0 0.0
        %370 = vmatpush1.msra.mxu0 0.0
        %371 = vmatprep.subr.mxu0 0.0
        %372 = vmatpush1.msra.mxu0 0.0
        %373 = vmatprep.subr.mxu0 0.0
        %374 = vmatpush1.msra.mxu0 0.0
        %375 = vmatprep.subr.mxu0 0.0
        %376 = vmatpush1.msra.mxu0 0.0
        %377 = vmatprep.subr.mxu0 0.0
        %378 = vmatpush1.msra.mxu0 0.0
        %379 = vmatprep.subr.mxu0 0.0
        %380 = vmatpush1.msra.mxu0 0.0
        %381 = vmatprep.subr.mxu0 0.0
        %382 = vmatpush1.msra.mxu0 0.0
        %383 = vmatprep.subr.mxu0 0.0
        %384 = vmatpush1.msra.mxu0 0.0
        %385 = vmatprep.subr.mxu0 0.0
        %386 = vmatpush1.msra.mxu0 0.0
        %387 = vmatprep.subr.mxu0 0.0
        %388 = vmatpush1.msra.mxu0 0.0
        %389 = vmatprep.subr.mxu0 0.0
        %390 = vmatpush1.msra.mxu0 0.0
        %391 = vmatprep.subr.mxu0 0.0
        %392 = vmatpush1.msra.mxu0 0.0
        %393 = vmatprep.subr.mxu0 0.0
        %394 = vmatpush1.msra.mxu0 0.0
        %395 = vmatprep.subr.mxu0 0.0
        %396 = vmatpush1.msra.mxu0 0.0
        %397 = vmatprep.mubr.f32.mxu0 0.0
        %398 = vmatmul.mubr.f32.gmra.mrb[0].mxu0 %v328
        %v399 = vpop.f32.mrb[0].mxu0
        %v400 = vadd.f32 0.0, %v399
        %v401 = vpop.f32.mrb[0].mxu0
        %402 = vdwg.mxu0
        %v404 = vsel %vm326, %v320, 0
        %v406 = vsel %vm330, %v319, 0
        %408 = vmatprep.subr.mxu0 0.0
        %409 = vmatpush1.msra.mxu0 %v406
        %410 = vmatprep.subr.mxu0 0.0
        %411 = vmatpush1.msra.mxu0 0.0
        %412 = vmatprep.subr.mxu0 0.0
        %413 = vmatpush1.msra.mxu0 0.0
        %414 = vmatprep.subr.mxu0 0.0
        %415 = vmatpush1.msra.mxu0 0.0
        %416 = vmatprep.subr.mxu0 0.0
        %417 = vmatpush1.msra.mxu0 0.0
        %418 = vmatprep.subr.mxu0 0.0
        %419 = vmatpush1.msra.mxu0 0.0
        %420 = vmatprep.subr.mxu0 0.0
        %421 = vmatpush1.msra.mxu0 0.0
        %422 = vmatprep.subr.mxu0 0.0
        %423 = vmatpush1.msra.mxu0 0.0
        %424 = vmatprep.subr.mxu0 0.0
        %425 = vmatpush1.msra.mxu0 0.0
        %426 = vmatprep.subr.mxu0 0.0
        %427 = vmatpush1.msra.mxu0 0.0
        %428 = vmatprep.subr.mxu0 0.0
        %429 = vmatpush1.msra.mxu0 0.0
        %430 = vmatprep.subr.mxu0 0.0
        %431 = vmatpush1.msra.mxu0 0.0
        %432 = vmatprep.subr.mxu0 0.0
        %433 = vmatpush1.msra.mxu0 0.0
        %434 = vmatprep.subr.mxu0 0.0
        %435 = vmatpush1.msra.mxu0 0.0
        %436 = vmatprep.subr.mxu0 0.0
        %437 = vmatpush1.msra.mxu0 0.0
        %438 = vmatprep.subr.mxu0 0.0
        %439 = vmatpush1.msra.mxu0 0.0
        %440 = vmatprep.subr.mxu0 0.0
        %441 = vmatpush1.msra.mxu0 0.0
        %442 = vmatprep.subr.mxu0 0.0
        %443 = vmatpush1.msra.mxu0 0.0
        %444 = vmatprep.subr.mxu0 0.0
        %445 = vmatpush1.msra.mxu0 0.0
        %446 = vmatprep.subr.mxu0 0.0
        %447 = vmatpush1.msra.mxu0 0.0
        %448 = vmatprep.subr.mxu0 0.0
        %449 = vmatpush1.msra.mxu0 0.0
        %450 = vmatprep.subr.mxu0 0.0
        %451 = vmatpush1.msra.mxu0 0.0
        %452 = vmatprep.subr.mxu0 0.0
        %453 = vmatpush1.msra.mxu0 0.0
        %454 = vmatprep.subr.mxu0 0.0
        %455 = vmatpush1.msra.mxu0 0.0
        %456 = vmatprep.subr.mxu0 0.0
        %457 = vmatpush1.msra.mxu0 0.0
        %458 = vmatprep.subr.mxu0 0.0
        %459 = vmatpush1.msra.mxu0 0.0
        %460 = vmatprep.subr.mxu0 0.0
        %461 = vmatpush1.msra.mxu0 0.0
        %462 = vmatprep.subr.mxu0 0.0
        %463 = vmatpush1.msra.mxu0 0.0
        %464 = vmatprep.subr.mxu0 0.0
        %465 = vmatpush1.msra.mxu0 0.0
        %466 = vmatprep.subr.mxu0 0.0
        %467 = vmatpush1.msra.mxu0 0.0
        %468 = vmatprep.subr.mxu0 0.0
        %469 = vmatpush1.msra.mxu0 0.0
        %470 = vmatprep.subr.mxu0 0.0
        %471 = vmatpush1.msra.mxu0 0.0
        %472 = vmatprep.mubr.f32.mxu0 0.0
        %473 = vmatmul.mubr.f32.gmra.mrb[0].mxu0 %v404
        %v474 = vpop.f32.mrb[0].mxu0
        %v475 = vadd.f32 %v400, %v474
        %v476 = vpop.f32.mrb[0].mxu0
        %477 = vdwg.mxu0
        %s478 = scalar_lea.vmem %s2, 16
        %v479 = vld [vmem:[%s478] sm:$0xff]
        %480 = vrot.lane.b32.xlu0 %v319, 126
        %v481 = vpop.permute.xlu0 %480
        %v483 = vsel %vm326, %v479, 0
        %v485 = vsel %vm330, %v481, 0
        %487 = vmatprep.subr.mxu0 0.0
        %488 = vmatpush1.msra.mxu0 %v485
        %489 = vmatprep.subr.mxu0 0.0
        %490 = vmatpush1.msra.mxu0 0.0
        %491 = vmatprep.subr.mxu0 0.0
        %492 = vmatpush1.msra.mxu0 0.0
        %493 = vmatprep.subr.mxu0 0.0
        %494 = vmatpush1.msra.mxu0 0.0
        %495 = vmatprep.subr.mxu0 0.0
        %496 = vmatpush1.msra.mxu0 0.0
        %497 = vmatprep.subr.mxu0 0.0
        %498 = vmatpush1.msra.mxu0 0.0
        %499 = vmatprep.subr.mxu0 0.0
        %500 = vmatpush1.msra.mxu0 0.0
        %501 = vmatprep.subr.mxu0 0.0
        %502 = vmatpush1.msra.mxu0 0.0
        %503 = vmatprep.subr.mxu0 0.0
        %504 = vmatpush1.msra.mxu0 0.0
        %505 = vmatprep.subr.mxu0 0.0
        %506 = vmatpush1.msra.mxu0 0.0
        %507 = vmatprep.subr.mxu0 0.0
        %508 = vmatpush1.msra.mxu0 0.0
        %509 = vmatprep.subr.mxu0 0.0
        %510 = vmatpush1.msra.mxu0 0.0
        %511 = vmatprep.subr.mxu0 0.0
        %512 = vmatpush1.msra.mxu0 0.0
        %513 = vmatprep.subr.mxu0 0.0
        %514 = vmatpush1.msra.mxu0 0.0
        %515 = vmatprep.subr.mxu0 0.0
        %516 = vmatpush1.msra.mxu0 0.0
        %517 = vmatprep.subr.mxu0 0.0
        %518 = vmatpush1.msra.mxu0 0.0
        %519 = vmatprep.subr.mxu0 0.0
        %520 = vmatpush1.msra.mxu0 0.0
        %521 = vmatprep.subr.mxu0 0.0
        %522 = vmatpush1.msra.mxu0 0.0
        %523 = vmatprep.subr.mxu0 0.0
        %524 = vmatpush1.msra.mxu0 0.0
        %525 = vmatprep.subr.mxu0 0.0
        %526 = vmatpush1.msra.mxu0 0.0
        %527 = vmatprep.subr.mxu0 0.0
        %528 = vmatpush1.msra.mxu0 0.0
        %529 = vmatprep.subr.mxu0 0.0
        %530 = vmatpush1.msra.mxu0 0.0
        %531 = vmatprep.subr.mxu0 0.0
        %532 = vmatpush1.msra.mxu0 0.0
        %533 = vmatprep.subr.mxu0 0.0
        %534 = vmatpush1.msra.mxu0 0.0
        %535 = vmatprep.subr.mxu0 0.0
        %536 = vmatpush1.msra.mxu0 0.0
        %537 = vmatprep.subr.mxu0 0.0
        %538 = vmatpush1.msra.mxu0 0.0
        %539 = vmatprep.subr.mxu0 0.0
        %540 = vmatpush1.msra.mxu0 0.0
        %541 = vmatprep.subr.mxu0 0.0
        %542 = vmatpush1.msra.mxu0 0.0
        %543 = vmatprep.subr.mxu0 0.0
        %544 = vmatpush1.msra.mxu0 0.0
        %545 = vmatprep.subr.mxu0 0.0
        %546 = vmatpush1.msra.mxu0 0.0
        %547 = vmatprep.subr.mxu0 0.0
        %548 = vmatpush1.msra.mxu0 0.0
        %549 = vmatprep.subr.mxu0 0.0
        %550 = vmatpush1.msra.mxu0 0.0
        %551 = vmatprep.mubr.f32.mxu0 0.0
        %552 = vmatmul.mubr.f32.gmra.mrb[0].mxu0 %v483
        %v553 = vpop.f32.mrb[0].mxu0
        %v554 = vadd.f32 0.0, %v553
        %v555 = vpop.f32.mrb[0].mxu0
        %556 = vdwg.mxu0
        %v557 = vadd.f32 %v475, %v554
        %s558 = scalar_lea.vmem %s2, 24
        %v559 = vld [vmem:[%s558] sm:$0xff]
        %560 = vrot.lane.b32.xlu0 %v319, 118
        %v561 = vpop.permute.xlu0 %560
        %v563 = vsel %vm326, %v559, 0
        %v565 = vsel %vm330, %v561, 0
        %567 = vmatprep.subr.mxu0 0.0
        %568 = vmatpush1.msra.mxu0 %v565
        %569 = vmatprep.subr.mxu0 0.0
        %570 = vmatpush1.msra.mxu0 0.0
        %571 = vmatprep.subr.mxu0 0.0
        %572 = vmatpush1.msra.mxu0 0.0
        %573 = vmatprep.subr.mxu0 0.0
        %574 = vmatpush1.msra.mxu0 0.0
        %575 = vmatprep.subr.mxu0 0.0
        %576 = vmatpush1.msra.mxu0 0.0
        %577 = vmatprep.subr.mxu0 0.0
        %578 = vmatpush1.msra.mxu0 0.0
        %579 = vmatprep.subr.mxu0 0.0
        %580 = vmatpush1.msra.mxu0 0.0
        %581 = vmatprep.subr.mxu0 0.0
        %582 = vmatpush1.msra.mxu0 0.0
        %583 = vmatprep.subr.mxu0 0.0
        %584 = vmatpush1.msra.mxu0 0.0
        %585 = vmatprep.subr.mxu0 0.0
        %586 = vmatpush1.msra.mxu0 0.0
        %587 = vmatprep.subr.mxu0 0.0
        %588 = vmatpush1.msra.mxu0 0.0
        %589 = vmatprep.subr.mxu0 0.0
        %590 = vmatpush1.msra.mxu0 0.0
        %591 = vmatprep.subr.mxu0 0.0
        %592 = vmatpush1.msra.mxu0 0.0
        %593 = vmatprep.subr.mxu0 0.0
        %594 = vmatpush1.msra.mxu0 0.0
        %595 = vmatprep.subr.mxu0 0.0
        %596 = vmatpush1.msra.mxu0 0.0
        %597 = vmatprep.subr.mxu0 0.0
        %598 = vmatpush1.msra.mxu0 0.0
        %599 = vmatprep.subr.mxu0 0.0
        %600 = vmatpush1.msra.mxu0 0.0
        %601 = vmatprep.subr.mxu0 0.0
        %602 = vmatpush1.msra.mxu0 0.0
        %603 = vmatprep.subr.mxu0 0.0
        %604 = vmatpush1.msra.mxu0 0.0
        %605 = vmatprep.subr.mxu0 0.0
        %606 = vmatpush1.msra.mxu0 0.0
        %607 = vmatprep.subr.mxu0 0.0
        %608 = vmatpush1.msra.mxu0 0.0
        %609 = vmatprep.subr.mxu0 0.0
        %610 = vmatpush1.msra.mxu0 0.0
        %611 = vmatprep.subr.mxu0 0.0
        %612 = vmatpush1.msra.mxu0 0.0
        %613 = vmatprep.subr.mxu0 0.0
        %614 = vmatpush1.msra.mxu0 0.0
        %615 = vmatprep.subr.mxu0 0.0
        %616 = vmatpush1.msra.mxu0 0.0
        %617 = vmatprep.subr.mxu0 0.0
        %618 = vmatpush1.msra.mxu0 0.0
        %619 = vmatprep.subr.mxu0 0.0
        %620 = vmatpush1.msra.mxu0 0.0
        %621 = vmatprep.subr.mxu0 0.0
        %622 = vmatpush1.msra.mxu0 0.0
        %623 = vmatprep.subr.mxu0 0.0
        %624 = vmatpush1.msra.mxu0 0.0
        %625 = vmatprep.subr.mxu0 0.0
        %626 = vmatpush1.msra.mxu0 0.0
        %627 = vmatprep.subr.mxu0 0.0
        %628 = vmatpush1.msra.mxu0 0.0
        %629 = vmatprep.subr.mxu0 0.0
        %630 = vmatpush1.msra.mxu0 0.0
        %631 = vmatprep.mubr.f32.mxu0 0.0
        %632 = vmatmul.mubr.f32.gmra.mrb[0].mxu0 %v563
        %v633 = vpop.f32.mrb[0].mxu0
        %v634 = vadd.f32 0.0, %v633
        %v635 = vpop.f32.mrb[0].mxu0
        %636 = vdwg.mxu0
        %v637 = vadd.f32 %v557, %v634
        %s638 = scalar_lea.vmem %s2, 32
        %v639 = vld [vmem:[%s638] sm:$0xff]
        %640 = vrot.lane.b32.xlu0 %v319, 117
        %v641 = vpop.permute.xlu0 %640
        %v643 = vsel %vm326, %v639, 0
        %v645 = vsel %vm330, %v641, 0
        %647 = vmatprep.subr.mxu0 0.0
        %648 = vmatpush1.msra.mxu0 %v645
        %649 = vmatprep.subr.mxu0 0.0
        %650 = vmatpush1.msra.mxu0 0.0
        %651 = vmatprep.subr.mxu0 0.0
        %652 = vmatpush1.msra.mxu0 0.0
        %653 = vmatprep.subr.mxu0 0.0
        %654 = vmatpush1.msra.mxu0 0.0
        %655 = vmatprep.subr.mxu0 0.0
        %656 = vmatpush1.msra.mxu0 0.0
        %657 = vmatprep.subr.mxu0 0.0
        %658 = vmatpush1.msra.mxu0 0.0
        %659 = vmatprep.subr.mxu0 0.0
        %660 = vmatpush1.msra.mxu0 0.0
        %661 = vmatprep.subr.mxu0 0.0
        %662 = vmatpush1.msra.mxu0 0.0
        %663 = vmatprep.subr.mxu0 0.0
        %664 = vmatpush1.msra.mxu0 0.0
        %665 = vmatprep.subr.mxu0 0.0
        %666 = vmatpush1.msra.mxu0 0.0
        %667 = vmatprep.subr.mxu0 0.0
        %668 = vmatpush1.msra.mxu0 0.0
        %669 = vmatprep.subr.mxu0 0.0
        %670 = vmatpush1.msra.mxu0 0.0
        %671 = vmatprep.subr.mxu0 0.0
        %672 = vmatpush1.msra.mxu0 0.0
        %673 = vmatprep.subr.mxu0 0.0
        %674 = vmatpush1.msra.mxu0 0.0
        %675 = vmatprep.subr.mxu0 0.0
        %676 = vmatpush1.msra.mxu0 0.0
        %677 = vmatprep.subr.mxu0 0.0
        %678 = vmatpush1.msra.mxu0 0.0
        %679 = vmatprep.subr.mxu0 0.0
        %680 = vmatpush1.msra.mxu0 0.0
        %681 = vmatprep.subr.mxu0 0.0
        %682 = vmatpush1.msra.mxu0 0.0
        %683 = vmatprep.subr.mxu0 0.0
        %684 = vmatpush1.msra.mxu0 0.0
        %685 = vmatprep.subr.mxu0 0.0
        %686 = vmatpush1.msra.mxu0 0.0
        %687 = vmatprep.subr.mxu0 0.0
        %688 = vmatpush1.msra.mxu0 0.0
        %689 = vmatprep.subr.mxu0 0.0
        %690 = vmatpush1.msra.mxu0 0.0
        %691 = vmatprep.subr.mxu0 0.0
        %692 = vmatpush1.msra.mxu0 0.0
        %693 = vmatprep.subr.mxu0 0.0
        %694 = vmatpush1.msra.mxu0 0.0
        %695 = vmatprep.subr.mxu0 0.0
        %696 = vmatpush1.msra.mxu0 0.0
        %697 = vmatprep.subr.mxu0 0.0
        %698 = vmatpush1.msra.mxu0 0.0
        %699 = vmatprep.subr.mxu0 0.0
        %700 = vmatpush1.msra.mxu0 0.0
        %701 = vmatprep.subr.mxu0 0.0
        %702 = vmatpush1.msra.mxu0 0.0
        %703 = vmatprep.subr.mxu0 0.0
        %704 = vmatpush1.msra.mxu0 0.0
        %705 = vmatprep.subr.mxu0 0.0
        %706 = vmatpush1.msra.mxu0 0.0
        %707 = vmatprep.subr.mxu0 0.0
        %708 = vmatpush1.msra.mxu0 0.0
        %709 = vmatprep.subr.mxu0 0.0
        %710 = vmatpush1.msra.mxu0 0.0
        %711 = vmatprep.mubr.f32.mxu0 0.0
        %712 = vmatmul.mubr.f32.gmra.mrb[0].mxu0 %v643
        %v713 = vpop.f32.mrb[0].mxu0
        %v714 = vadd.f32 0.0, %v713
        %v715 = vpop.f32.mrb[0].mxu0
        %716 = vdwg.mxu0
        %v717 = vadd.f32 %v637, %v714
        %s718 = scalar_lea.vmem %s2, 40
        %v719 = vld [vmem:[%s718] sm:$0xff]
        %720 = vrot.lane.b32.xlu0 %v319, 116
        %v721 = vpop.permute.xlu0 %720
        %v723 = vsel %vm326, %v719, 0
        %v725 = vsel %vm330, %v721, 0
        %727 = vmatprep.subr.mxu0 0.0
        %728 = vmatpush1.msra.mxu0 %v725
        %729 = vmatprep.subr.mxu0 0.0
        %730 = vmatpush1.msra.mxu0 0.0
        %731 = vmatprep.subr.mxu0 0.0
        %732 = vmatpush1.msra.mxu0 0.0
        %733 = vmatprep.subr.mxu0 0.0
        %734 = vmatpush1.msra.mxu0 0.0
        %735 = vmatprep.subr.mxu0 0.0
        %736 = vmatpush1.msra.mxu0 0.0
        %737 = vmatprep.subr.mxu0 0.0
        %738 = vmatpush1.msra.mxu0 0.0
        %739 = vmatprep.subr.mxu0 0.0
        %740 = vmatpush1.msra.mxu0 0.0
        %741 = vmatprep.subr.mxu0 0.0
        %742 = vmatpush1.msra.mxu0 0.0
        %743 = vmatprep.subr.mxu0 0.0
        %744 = vmatpush1.msra.mxu0 0.0
        %745 = vmatprep.subr.mxu0 0.0
        %746 = vmatpush1.msra.mxu0 0.0
        %747 = vmatprep.subr.mxu0 0.0
        %748 = vmatpush1.msra.mxu0 0.0
        %749 = vmatprep.subr.mxu0 0.0
        %750 = vmatpush1.msra.mxu0 0.0
        %751 = vmatprep.subr.mxu0 0.0
        %752 = vmatpush1.msra.mxu0 0.0
        %753 = vmatprep.subr.mxu0 0.0
        %754 = vmatpush1.msra.mxu0 0.0
        %755 = vmatprep.subr.mxu0 0.0
        %756 = vmatpush1.msra.mxu0 0.0
        %757 = vmatprep.subr.mxu0 0.0
        %758 = vmatpush1.msra.mxu0 0.0
        %759 = vmatprep.subr.mxu0 0.0
        %760 = vmatpush1.msra.mxu0 0.0
        %761 = vmatprep.subr.mxu0 0.0
        %762 = vmatpush1.msra.mxu0 0.0
        %763 = vmatprep.subr.mxu0 0.0
        %764 = vmatpush1.msra.mxu0 0.0
        %765 = vmatprep.subr.mxu0 0.0
        %766 = vmatpush1.msra.mxu0 0.0
        %767 = vmatprep.subr.mxu0 0.0
        %768 = vmatpush1.msra.mxu0 0.0
        %769 = vmatprep.subr.mxu0 0.0
        %770 = vmatpush1.msra.mxu0 0.0
        %771 = vmatprep.subr.mxu0 0.0
        %772 = vmatpush1.msra.mxu0 0.0
        %773 = vmatprep.subr.mxu0 0.0
        %774 = vmatpush1.msra.mxu0 0.0
        %775 = vmatprep.subr.mxu0 0.0
        %776 = vmatpush1.msra.mxu0 0.0
        %777 = vmatprep.subr.mxu0 0.0
        %778 = vmatpush1.msra.mxu0 0.0
        %779 = vmatprep.subr.mxu0 0.0
        %780 = vmatpush1.msra.mxu0 0.0
        %781 = vmatprep.subr.mxu0 0.0
        %782 = vmatpush1.msra.mxu0 0.0
        %783 = vmatprep.subr.mxu0 0.0
        %784 = vmatpush1.msra.mxu0 0.0
        %785 = vmatprep.subr.mxu0 0.0
        %786 = vmatpush1.msra.mxu0 0.0
        %787 = vmatprep.subr.mxu0 0.0
        %788 = vmatpush1.msra.mxu0 0.0
        %789 = vmatprep.subr.mxu0 0.0
        %790 = vmatpush1.msra.mxu0 0.0
        %791 = vmatprep.mubr.f32.mxu0 0.0
        %792 = vmatmul.mubr.f32.gmra.mrb[0].mxu0 %v723
        %v793 = vpop.f32.mrb[0].mxu0
        %v794 = vadd.f32 0.0, %v793
        %v795 = vpop.f32.mrb[0].mxu0
        %796 = vdwg.mxu0
        %v797 = vadd.f32 %v717, %v794
        %s798 = scalar_lea.vmem %s2, 48
        %v799 = vld [vmem:[%s798] sm:$0xff]
        %800 = vrot.lane.b32.xlu0 %v319, 108
        %v801 = vpop.permute.xlu0 %800
        %v803 = vsel %vm326, %v799, 0
        %v805 = vsel %vm330, %v801, 0
        %807 = vmatprep.subr.mxu0 0.0
        %808 = vmatpush1.msra.mxu0 %v805
        %809 = vmatprep.subr.mxu0 0.0
        %810 = vmatpush1.msra.mxu0 0.0
        %811 = vmatprep.subr.mxu0 0.0
        %812 = vmatpush1.msra.mxu0 0.0
        %813 = vmatprep.subr.mxu0 0.0
        %814 = vmatpush1.msra.mxu0 0.0
        %815 = vmatprep.subr.mxu0 0.0
        %816 = vmatpush1.msra.mxu0 0.0
        %817 = vmatprep.subr.mxu0 0.0
        %818 = vmatpush1.msra.mxu0 0.0
        %819 = vmatprep.subr.mxu0 0.0
        %820 = vmatpush1.msra.mxu0 0.0
        %821 = vmatprep.subr.mxu0 0.0
        %822 = vmatpush1.msra.mxu0 0.0
        %823 = vmatprep.subr.mxu0 0.0
        %824 = vmatpush1.msra.mxu0 0.0
        %825 = vmatprep.subr.mxu0 0.0
        %826 = vmatpush1.msra.mxu0 0.0
        %827 = vmatprep.subr.mxu0 0.0
        %828 = vmatpush1.msra.mxu0 0.0
        %829 = vmatprep.subr.mxu0 0.0
        %830 = vmatpush1.msra.mxu0 0.0
        %831 = vmatprep.subr.mxu0 0.0
        %832 = vmatpush1.msra.mxu0 0.0
        %833 = vmatprep.subr.mxu0 0.0
        %834 = vmatpush1.msra.mxu0 0.0
        %835 = vmatprep.subr.mxu0 0.0
        %836 = vmatpush1.msra.mxu0 0.0
        %837 = vmatprep.subr.mxu0 0.0
        %838 = vmatpush1.msra.mxu0 0.0
        %839 = vmatprep.subr.mxu0 0.0
        %840 = vmatpush1.msra.mxu0 0.0
        %841 = vmatprep.subr.mxu0 0.0
        %842 = vmatpush1.msra.mxu0 0.0
        %843 = vmatprep.subr.mxu0 0.0
        %844 = vmatpush1.msra.mxu0 0.0
        %845 = vmatprep.subr.mxu0 0.0
        %846 = vmatpush1.msra.mxu0 0.0
        %847 = vmatprep.subr.mxu0 0.0
        %848 = vmatpush1.msra.mxu0 0.0
        %849 = vmatprep.subr.mxu0 0.0
        %850 = vmatpush1.msra.mxu0 0.0
        %851 = vmatprep.subr.mxu0 0.0
        %852 = vmatpush1.msra.mxu0 0.0
        %853 = vmatprep.subr.mxu0 0.0
        %854 = vmatpush1.msra.mxu0 0.0
        %855 = vmatprep.subr.mxu0 0.0
        %856 = vmatpush1.msra.mxu0 0.0
        %857 = vmatprep.subr.mxu0 0.0
        %858 = vmatpush1.msra.mxu0 0.0
        %859 = vmatprep.subr.mxu0 0.0
        %860 = vmatpush1.msra.mxu0 0.0
        %861 = vmatprep.subr.mxu0 0.0
        %862 = vmatpush1.msra.mxu0 0.0
        %863 = vmatprep.subr.mxu0 0.0
        %864 = vmatpush1.msra.mxu0 0.0
        %865 = vmatprep.subr.mxu0 0.0
        %866 = vmatpush1.msra.mxu0 0.0
        %867 = vmatprep.subr.mxu0 0.0
        %868 = vmatpush1.msra.mxu0 0.0
        %869 = vmatprep.subr.mxu0 0.0
        %870 = vmatpush1.msra.mxu0 0.0
        %871 = vmatprep.mubr.f32.mxu0 0.0
        %872 = vmatmul.mubr.f32.gmra.mrb[0].mxu0 %v803
        %v873 = vpop.f32.mrb[0].mxu0
        %v874 = vadd.f32 0.0, %v873
        %v875 = vpop.f32.mrb[0].mxu0
        %876 = vdwg.mxu0
        %v877 = vadd.f32 %v797, %v874
        %s878 = scalar_lea.vmem %s2, 56
        %v879 = vld [vmem:[%s878] sm:$0xff]
        %880 = vrot.lane.b32.xlu0 %v319, 107
        %v881 = vpop.permute.xlu0 %880
        %v883 = vsel %vm326, %v879, 0
        %v885 = vsel %vm330, %v881, 0
        %887 = vmatprep.subr.mxu0 0.0
        %888 = vmatpush1.msra.mxu0 %v885
        %889 = vmatprep.subr.mxu0 0.0
        %890 = vmatpush1.msra.mxu0 0.0
        %891 = vmatprep.subr.mxu0 0.0
        %892 = vmatpush1.msra.mxu0 0.0
        %893 = vmatprep.subr.mxu0 0.0
        %894 = vmatpush1.msra.mxu0 0.0
        %895 = vmatprep.subr.mxu0 0.0
        %896 = vmatpush1.msra.mxu0 0.0
        %897 = vmatprep.subr.mxu0 0.0
        %898 = vmatpush1.msra.mxu0 0.0
        %899 = vmatprep.subr.mxu0 0.0
        %900 = vmatpush1.msra.mxu0 0.0
        %901 = vmatprep.subr.mxu0 0.0
        %902 = vmatpush1.msra.mxu0 0.0
        %903 = vmatprep.subr.mxu0 0.0
        %904 = vmatpush1.msra.mxu0 0.0
        %905 = vmatprep.subr.mxu0 0.0
        %906 = vmatpush1.msra.mxu0 0.0
        %907 = vmatprep.subr.mxu0 0.0
        %908 = vmatpush1.msra.mxu0 0.0
        %909 = vmatprep.subr.mxu0 0.0
        %910 = vmatpush1.msra.mxu0 0.0
        %911 = vmatprep.subr.mxu0 0.0
        %912 = vmatpush1.msra.mxu0 0.0
        %913 = vmatprep.subr.mxu0 0.0
        %914 = vmatpush1.msra.mxu0 0.0
        %915 = vmatprep.subr.mxu0 0.0
        %916 = vmatpush1.msra.mxu0 0.0
        %917 = vmatprep.subr.mxu0 0.0
        %918 = vmatpush1.msra.mxu0 0.0
        %919 = vmatprep.subr.mxu0 0.0
        %920 = vmatpush1.msra.mxu0 0.0
        %921 = vmatprep.subr.mxu0 0.0
        %922 = vmatpush1.msra.mxu0 0.0
        %923 = vmatprep.subr.mxu0 0.0
        %924 = vmatpush1.msra.mxu0 0.0
        %925 = vmatprep.subr.mxu0 0.0
        %926 = vmatpush1.msra.mxu0 0.0
        %927 = vmatprep.subr.mxu0 0.0
        %928 = vmatpush1.msra.mxu0 0.0
        %929 = vmatprep.subr.mxu0 0.0
        %930 = vmatpush1.msra.mxu0 0.0
        %931 = vmatprep.subr.mxu0 0.0
        %932 = vmatpush1.msra.mxu0 0.0
        %933 = vmatprep.subr.mxu0 0.0
        %934 = vmatpush1.msra.mxu0 0.0
        %935 = vmatprep.subr.mxu0 0.0
        %936 = vmatpush1.msra.mxu0 0.0
        %937 = vmatprep.subr.mxu0 0.0
        %938 = vmatpush1.msra.mxu0 0.0
        %939 = vmatprep.subr.mxu0 0.0
        %940 = vmatpush1.msra.mxu0 0.0
        %941 = vmatprep.subr.mxu0 0.0
        %942 = vmatpush1.msra.mxu0 0.0
        %943 = vmatprep.subr.mxu0 0.0
        %944 = vmatpush1.msra.mxu0 0.0
        %945 = vmatprep.subr.mxu0 0.0
        %946 = vmatpush1.msra.mxu0 0.0
        %947 = vmatprep.subr.mxu0 0.0
        %948 = vmatpush1.msra.mxu0 0.0
        %949 = vmatprep.subr.mxu0 0.0
        %950 = vmatpush1.msra.mxu0 0.0
        %951 = vmatprep.mubr.f32.mxu0 0.0
        %952 = vmatmul.mubr.f32.gmra.mrb[0].mxu0 %v883
        %v953 = vpop.f32.mrb[0].mxu0
        %v954 = vadd.f32 0.0, %v953
        %v955 = vpop.f32.mrb[0].mxu0
        %956 = vdwg.mxu0
        %v957 = vadd.f32 %v877, %v954
        %s958 = scalar_lea.vmem %s2, 64
        %v959 = vld [vmem:[%s958] sm:$0xff]
        %960 = vrot.lane.b32.xlu0 %v319, 106
        %v961 = vpop.permute.xlu0 %960
        %v963 = vsel %vm326, %v959, 0
        %v965 = vsel %vm330, %v961, 0
        %967 = vmatprep.subr.mxu0 0.0
        %968 = vmatpush1.msra.mxu0 %v965
        %969 = vmatprep.subr.mxu0 0.0
        %970 = vmatpush1.msra.mxu0 0.0
        %971 = vmatprep.subr.mxu0 0.0
        %972 = vmatpush1.msra.mxu0 0.0
        %973 = vmatprep.subr.mxu0 0.0
        %974 = vmatpush1.msra.mxu0 0.0
        %975 = vmatprep.subr.mxu0 0.0
        %976 = vmatpush1.msra.mxu0 0.0
        %977 = vmatprep.subr.mxu0 0.0
        %978 = vmatpush1.msra.mxu0 0.0
        %979 = vmatprep.subr.mxu0 0.0
        %980 = vmatpush1.msra.mxu0 0.0
        %981 = vmatprep.subr.mxu0 0.0
        %982 = vmatpush1.msra.mxu0 0.0
        %983 = vmatprep.subr.mxu0 0.0
        %984 = vmatpush1.msra.mxu0 0.0
        %985 = vmatprep.subr.mxu0 0.0
        %986 = vmatpush1.msra.mxu0 0.0
        %987 = vmatprep.subr.mxu0 0.0
        %988 = vmatpush1.msra.mxu0 0.0
        %989 = vmatprep.subr.mxu0 0.0
        %990 = vmatpush1.msra.mxu0 0.0
        %991 = vmatprep.subr.mxu0 0.0
        %992 = vmatpush1.msra.mxu0 0.0
        %993 = vmatprep.subr.mxu0 0.0
        %994 = vmatpush1.msra.mxu0 0.0
        %995 = vmatprep.subr.mxu0 0.0
        %996 = vmatpush1.msra.mxu0 0.0
        %997 = vmatprep.subr.mxu0 0.0
        %998 = vmatpush1.msra.mxu0 0.0
        %999 = vmatprep.subr.mxu0 0.0
        %1000 = vmatpush1.msra.mxu0 0.0
        %1001 = vmatprep.subr.mxu0 0.0
        %1002 = vmatpush1.msra.mxu0 0.0
        %1003 = vmatprep.subr.mxu0 0.0
        %1004 = vmatpush1.msra.mxu0 0.0
        %1005 = vmatprep.subr.mxu0 0.0
        %1006 = vmatpush1.msra.mxu0 0.0
        %1007 = vmatprep.subr.mxu0 0.0
        %1008 = vmatpush1.msra.mxu0 0.0
        %1009 = vmatprep.subr.mxu0 0.0
        %1010 = vmatpush1.msra.mxu0 0.0
        %1011 = vmatprep.subr.mxu0 0.0
        %1012 = vmatpush1.msra.mxu0 0.0
        %1013 = vmatprep.subr.mxu0 0.0
        %1014 = vmatpush1.msra.mxu0 0.0
        %1015 = vmatprep.subr.mxu0 0.0
        %1016 = vmatpush1.msra.mxu0 0.0
        %1017 = vmatprep.subr.mxu0 0.0
        %1018 = vmatpush1.msra.mxu0 0.0
        %1019 = vmatprep.subr.mxu0 0.0
        %1020 = vmatpush1.msra.mxu0 0.0
        %1021 = vmatprep.subr.mxu0 0.0
        %1022 = vmatpush1.msra.mxu0 0.0
        %1023 = vmatprep.subr.mxu0 0.0
        %1024 = vmatpush1.msra.mxu0 0.0
        %1025 = vmatprep.subr.mxu0 0.0
        %1026 = vmatpush1.msra.mxu0 0.0
        %1027 = vmatprep.subr.mxu0 0.0
        %1028 = vmatpush1.msra.mxu0 0.0
        %1029 = vmatprep.subr.mxu0 0.0
        %1030 = vmatpush1.msra.mxu0 0.0
        %1031 = vmatprep.mubr.f32.mxu0 0.0
        %1032 = vmatmul.mubr.f32.gmra.mrb[0].mxu0 %v963
        %v1033 = vpop.f32.mrb[0].mxu0
        %v1034 = vadd.f32 0.0, %v1033
        %v1035 = vpop.f32.mrb[0].mxu0
        %1036 = vdwg.mxu0
        %v1037 = vadd.f32 %v957, %v1034
        %v1038 = vld [vmem:[%s3] sm:$0xff]
        %1040 = vset.pattern.permute.xlu0 0
        %1041 = vperm.xlu0 %1040, %v1038
        %v1042 = vpop.permute.xlu0 %1041
        %v1044 = vadd.f32 %v1037, %v1042
        %v1045 = vld [vmem:[%s4] sm:$0xff]
        %v1046 = vld [vmem:[%s5] sm:$0xff]
        %1048 = vset.pattern.permute.xlu0 0
        %1049 = vperm.xlu0 %1048, %v1046
        %v1050 = vpop.permute.xlu0 %1049
        %v1053 = vsel %vm326, %v1045, 0
        %1055 = vmatprep.subr.mxu0 0.0
        %1056 = vmatpush1.msra.mxu0 %v645
        %1057 = vmatprep.subr.mxu0 0.0
        %1058 = vmatpush1.msra.mxu0 0.0
        %1059 = vmatprep.subr.mxu0 0.0
        %1060 = vmatpush1.msra.mxu0 0.0
        %1061 = vmatprep.subr.mxu0 0.0
        %1062 = vmatpush1.msra.mxu0 0.0
        %1063 = vmatprep.subr.mxu0 0.0
        %1064 = vmatpush1.msra.mxu0 0.0
        %1065 = vmatprep.subr.mxu0 0.0
        %1066 = vmatpush1.msra.mxu0 0.0
        %1067 = vmatprep.subr.mxu0 0.0
        %1068 = vmatpush1.msra.mxu0 0.0
        %1069 = vmatprep.subr.mxu0 0.0
        %1070 = vmatpush1.msra.mxu0 0.0
        %1071 = vmatprep.subr.mxu0 0.0
        %1072 = vmatpush1.msra.mxu0 0.0
        %1073 = vmatprep.subr.mxu0 0.0
        %1074 = vmatpush1.msra.mxu0 0.0
        %1075 = vmatprep.subr.mxu0 0.0
        %1076 = vmatpush1.msra.mxu0 0.0
        %1077 = vmatprep.subr.mxu0 0.0
        %1078 = vmatpush1.msra.mxu0 0.0
        %1079 = vmatprep.subr.mxu0 0.0
        %1080 = vmatpush1.msra.mxu0 0.0
        %1081 = vmatprep.subr.mxu0 0.0
        %1082 = vmatpush1.msra.mxu0 0.0
        %1083 = vmatprep.subr.mxu0 0.0
        %1084 = vmatpush1.msra.mxu0 0.0
        %1085 = vmatprep.subr.mxu0 0.0
        %1086 = vmatpush1.msra.mxu0 0.0
        %1087 = vmatprep.subr.mxu0 0.0
        %1088 = vmatpush1.msra.mxu0 0.0
        %1089 = vmatprep.subr.mxu0 0.0
        %1090 = vmatpush1.msra.mxu0 0.0
        %1091 = vmatprep.subr.mxu0 0.0
        %1092 = vmatpush1.msra.mxu0 0.0
        %1093 = vmatprep.subr.mxu0 0.0
        %1094 = vmatpush1.msra.mxu0 0.0
        %1095 = vmatprep.subr.mxu0 0.0
        %1096 = vmatpush1.msra.mxu0 0.0
        %1097 = vmatprep.subr.mxu0 0.0
        %1098 = vmatpush1.msra.mxu0 0.0
        %1099 = vmatprep.subr.mxu0 0.0
        %1100 = vmatpush1.msra.mxu0 0.0
        %1101 = vmatprep.subr.mxu0 0.0
        %1102 = vmatpush1.msra.mxu0 0.0
        %1103 = vmatprep.subr.mxu0 0.0
        %1104 = vmatpush1.msra.mxu0 0.0
        %1105 = vmatprep.subr.mxu0 0.0
        %1106 = vmatpush1.msra.mxu0 0.0
        %1107 = vmatprep.subr.mxu0 0.0
        %1108 = vmatpush1.msra.mxu0 0.0
        %1109 = vmatprep.subr.mxu0 0.0
        %1110 = vmatpush1.msra.mxu0 0.0
        %1111 = vmatprep.subr.mxu0 0.0
        %1112 = vmatpush1.msra.mxu0 0.0
        %1113 = vmatprep.subr.mxu0 0.0
        %1114 = vmatpush1.msra.mxu0 0.0
        %1115 = vmatprep.subr.mxu0 0.0
        %1116 = vmatpush1.msra.mxu0 0.0
        %1117 = vmatprep.subr.mxu0 0.0
        %1118 = vmatpush1.msra.mxu0 0.0
        %1119 = vmatprep.mubr.f32.mxu0 0.0
        %1120 = vmatmul.mubr.f32.gmra.mrb[0].mxu0 %v1053
        %v1121 = vpop.f32.mrb[0].mxu0
        %v1122 = vadd.f32 %v1050, %v1121
        %v1123 = vpop.f32.mrb[0].mxu0
        %1124 = vdwg.mxu0
        %v1125 = vmul.f32 %v1122, 2.0
        %v1126 = vadd.f32 %v1125, 1.0
        %v1127 = vmul.f32 %v1044, %v1044
        %v1128 = vsub.f32 %v1126, %v1127
        %v1129 = vmul.f32 %v1125, 1.442695
        %v1130 = vpow.pop %v1129
        %v1131 = vsub.f32 %v1128, %v1130
        %v1133 = vlaneseq
        %v1134 = vshrl.u32 %v1133, 7
        %v1135 = vsub.s32 0, %v1134
        %v1136 = vrot.slane %v318, %v1135
        %v1138 = vmul.f32 %v1131, %v1136
        %vm1139 = vcmask 818176
        %v1140 = vsel %vm1139, %v1138, 0.0
        %1141 = vadd.xlane.f32.xlu0 %v1140
        %v1142 = vpop.xlane.xlu0 %1141
        %v1143 = vrot.slane %v1142, 4
        %v1144 = vadd.f32 %v1142, %v1143
        %v1145 = vrot.slane %v1144, 2
        %v1146 = vadd.f32 %v1144, %v1145
        %v1147 = vrot.slane %v1146, 1
        %v1148 = vadd.f32 %v1146, %v1147
        %s1149 = vtos %v1148
        %1150 = vst.msk [vmem:[%s300] sm:$0xff] %vm1139, %v1044
        %v1151 = vsub.f32 1.0, %v1122
        %v1152 = vmul.f32 %v1044, %v1151
        %1153 = vst.msk [vmem:[%s307] sm:$0xff] %vm1139, %v1152
        %v1154 = vstv %s1149
        %1155 = vst [vmem:[%s313] sm:$0x1] %v1154
        %s1156 = sand.u32 %s165, 1
        %s1157 = scalar_lea.sflag [#allocation3], %s1156
        %s1158 = sand.u32 %s165, 1
        %s1159 = smul.addr %s1158, 8
        %s1160 = scalar_lea.vmem [#allocation2], %s1159
        %s1161 = sand.u32 %s26, 1
        %s1162 = scalar_lea.sflag [#allocation5], %s1161
        %s1163 = sand.u32 %s191, 1
        %s1164 = smul.addr %s1163, 8
        %s1165 = scalar_lea.vmem [#allocation4], %s1164
        %s1166 = sand.u32 %s26, 1
        %s1167 = scalar_lea.sflag [#allocation5], %s1166
        %s1168 = sand.u32 %s217, 1
        %s1169 = scalar_lea.vmem [#allocation6], %s1168
        // Predicated region
        $region45: #{tpu_custom_call.1} parent=43 // pred_check
          %p1170 = pneg %p175
        $region46: #{tpu_custom_call.1} parent=43 // pred_check_branch
          %1172 = sbr.rel (%p1170) target = $region48
        $region47: #{tpu_custom_call.1} parent=43 // pred_region
          %s1174 = ssub.s32 128, 128
          %1175 = vsyncadd %s1157, %s1174
          %s1176 = smul.addr %s26, 128
          %s1177 = scalar_lea.hbm %s6, %s1176
          %s1179 = sshll.u32 %s1160, 4
          %s1180 = int_to_ptr.vmem [resolvable:$true] %s1179
          %1182 = dma.vmem_to_hbm [thread:$0]  %s1180, 128, %s1177, %s1157
        $region48: #{tpu_custom_call.1} parent=43 // pred_fallthru
          _
        // Predicated region
        $region49: #{tpu_custom_call.1} parent=43 // pred_check
          %p1183 = pneg %p201
        $region50: #{tpu_custom_call.1} parent=43 // pred_check_branch
          %1185 = sbr.rel (%p1183) target = $region52
        $region51: #{tpu_custom_call.1} parent=43 // pred_region
          %s1187 = ssub.s32 128, 128
          %1188 = vsyncadd %s1162, %s1187
          %s1189 = smul.addr %s26, 128
          %s1190 = scalar_lea.hbm %s7, %s1189
          %s1192 = sshll.u32 %s1165, 4
          %s1193 = int_to_ptr.vmem [resolvable:$true] %s1192
          %1195 = dma.vmem_to_hbm [thread:$0]  %s1193, 128, %s1190, %s1162
        $region52: #{tpu_custom_call.1} parent=43 // pred_fallthru
          _
        // Predicated region
        $region53: #{tpu_custom_call.1} parent=43 // pred_check
          %p1196 = pneg %p227
        $region54: #{tpu_custom_call.1} parent=43 // pred_check_branch
          %1198 = sbr.rel (%p1196) target = $region56
        $region55: #{tpu_custom_call.1} parent=43 // pred_region
          %s1200 = ssub.s32 16, 16
          %1201 = vsyncadd %s1167, %s1200
          %s1202 = smul.addr %s26, 16
          %s1203 = scalar_lea.hbm %s8, %s1202
          %s1205 = sshll.u32 %s1169, 4
          %s1206 = int_to_ptr.vmem [resolvable:$true] %s1205
          %1208 = dma.vmem_to_hbm [thread:$0]  %s1206, 16, %s1203, %s1167
        $region56: #{tpu_custom_call.1} parent=43 // pred_fallthru
          _
      $region44: #{tpu_custom_call.1} parent=5 // pred_fallthru
        _
      %p1209 = scmp.le.s32.totalorder 2, %s21
      // Predicated region
      $region57: #{tpu_custom_call.1} parent=5 // pred_check
        %p1210 = pneg %p1209
      $region58: #{tpu_custom_call.1} parent=5 // pred_check_branch
        %1212 = sbr.rel (%p1210) target = $region60
      $region59: #{tpu_custom_call.1} parent=5 // pred_region
        %s1213 = ssub.s32 %s21, 2
        // Predicated region
        $region61: #{tpu_custom_call.1} parent=59 // pred_check
          %p1214 = pneg %p181
        $region62: #{tpu_custom_call.1} parent=59 // pred_check_branch
          %1216 = sbr.rel (%p1214) target = $region64
        $region63: #{tpu_custom_call.1} parent=59 // pred_region
          %s1217 = sand.u32 %s166, 1
          %s1218 = scalar_lea.sflag [#allocation3], %s1217
          %s1219 = sand.u32 %s166, 1
          %s1220 = smul.addr %s1219, 8
          %s1221 = scalar_lea.vmem [#allocation2], %s1220
          %1222 = dma.done %s1218, 128
        $region64: #{tpu_custom_call.1} parent=59 // pred_fallthru
          _
        // Predicated region
        $region65: #{tpu_custom_call.1} parent=59 // pred_check
          %p1223 = pneg %p207
        $region66: #{tpu_custom_call.1} parent=59 // pred_check_branch
          %1225 = sbr.rel (%p1223) target = $region68
        $region67: #{tpu_custom_call.1} parent=59 // pred_region
          %s1226 = sand.u32 %s27, 1
          %s1227 = scalar_lea.sflag [#allocation5], %s1226
          %s1228 = sand.u32 %s192, 1
          %s1229 = smul.addr %s1228, 8
          %s1230 = scalar_lea.vmem [#allocation4], %s1229
          %1231 = dma.done %s1227, 128
        $region68: #{tpu_custom_call.1} parent=59 // pred_fallthru
          _
        // Predicated region
        $region69: #{tpu_custom_call.1} parent=59 // pred_check
          %p1232 = pneg %p233
        $region70: #{tpu_custom_call.1} parent=59 // pred_check_branch
          %1234 = sbr.rel (%p1232) target = $region72
        $region71: #{tpu_custom_call.1} parent=59 // pred_region
          %s1235 = sand.u32 %s27, 1
          %s1236 = scalar_lea.sflag [#allocation5], %s1235
          %s1237 = sand.u32 %s218, 1
          %s1238 = scalar_lea.vmem [#allocation6], %s1237
          %1239 = dma.done %s1236, 16
        $region72: #{tpu_custom_call.1} parent=59 // pred_fallthru
          _
      $region60: #{tpu_custom_call.1} parent=5 // pred_fallthru
        _
    $region6: #{tpu_custom_call.1} parent=1 // loop_footer
      %s25 = sadd.s32 1, %s21
    $region7: #{tpu_custom_call.1} parent=1 // loop_footer_branch
      %20 = sbr.rel target = $region3
    $region8: #{tpu_custom_call.1} parent=1 // loop_exit
      _
    %1240 = vsyncpa [#allocation3], 1
    %s1241 = scalar_lea.sflag [#allocation3], 1
    %1242 = vsyncpa %s1241, 1
    %1243 = vsyncpa [#allocation5], 1
    %s1244 = scalar_lea.sflag [#allocation5], 1
    %1245 = vsyncpa %s1244, 1

</llo_original>
